<compile_context>
chip_gen: v7x
topology: tpu7x:2x2x1
jax: 0.10.0
libtpu: 0.0.40
codegen_flags: <defaults>
</compile_context>

<pallas_src>
import jax
import jax.numpy as jnp
from jax.experimental import pallas as pl
from jax.experimental.pallas import tpu as pltpu


def make_encoder_kernel(S, B, H, V, E, num_layers):
    """Fused encoder kernel for static shapes.

    Ref layout:
      refs[0]                 token ids        (S*B, 1)   int32
      refs[1]                 embedding table  (V, E)     f32   (vocab padded)
      refs[2+3l .. 4+3l]      per-layer W_ih^T (in_l,4H), W_hh^T (H,4H), bias (1,4H)
                              (gate columns pre-reordered to [i, f, o, g])
      refs[2+3L], refs[3+3L]  outputs: hidden, cell  (num_layers, B, H)
      refs[4+3L]              x_proj scratch   (S*B, 4H)  f32
      refs[5+3L]              h-sequence scratch (S*B, H) f32 (only if num_layers>1)
    """
    SB = S * B
    unroll = True if S <= 16 else 4   # guard against vreg spill / istream bloat

    def kernel(*refs):
        ids_ref = refs[0]
        emb_ref = refs[1]
        wih_refs = [refs[2 + 3 * l] for l in range(num_layers)]
        whh_refs = [refs[3 + 3 * l] for l in range(num_layers)]
        b_refs = [refs[4 + 3 * l] for l in range(num_layers)]
        off = 2 + 3 * num_layers
        hidden_ref = refs[off]
        cell_ref = refs[off + 1]
        xproj_scr = refs[off + 2]
        hseq_scr = refs[off + 3] if num_layers > 1 else None

        # ---- Embedding lookup for ALL timesteps: one one-hot MXU matmul ----
        # Exact: one-hot selects exactly one table row; padded vocab lanes never
        # match real ids (< V) and contribute exact zeros.
        vocab_iota = jax.lax.broadcasted_iota(jnp.int32, (SB, V), 1)
        one_hot = (vocab_iota == ids_ref[...]).astype(jnp.float32)       # (SB, V)
        x_in = jnp.dot(one_hot, emb_ref[...],
                       preferred_element_type=jnp.float32)               # (SB, E)
        # Dropout on the embedding = identity (eval mode).

        for l in range(num_layers):
            last_layer = (l == num_layers - 1)

            # ---- Hoisted whole-sequence input projection (off the critical path) ----
            xproj_scr[...] = (
                jnp.dot(x_in, wih_refs[l][...],
                        preferred_element_type=jnp.float32)
                + b_refs[l][...]                                          # bias folded in
            )

            # Recurrent weight read once; stays resident in vregs across the loop.
            whh = whh_refs[l][...]                                        # (H, 4H)

            def step(t, carry, whh=whh, last_layer=last_layer):
                h, c = carry
                base = pl.multiple_of(t * B, 8)
                gates = (xproj_scr[pl.ds(base, B), :]
                         + jnp.dot(h, whh, preferred_element_type=jnp.float32))
                # Gate order is [i, f, o, g] (reordered in the wrapper):
                ifo = jax.nn.sigmoid(gates[:, :3 * H])                   # one EUP slab
                g_g = jnp.tanh(gates[:, 3 * H:])
                i_g = ifo[:, 0 * H:1 * H]
                f_g = ifo[:, 1 * H:2 * H]
                o_g = ifo[:, 2 * H:3 * H]
                c_new = f_g * c + i_g * g_g
                h_new = o_g * jnp.tanh(c_new)
                if not last_layer:
                    # Inter-layer dropout = identity (eval mode).
                    hseq_scr[pl.ds(base, B), :] = h_new
                return h_new, c_new

            h0 = jnp.zeros((B, H), jnp.float32)
            c0 = jnp.zeros((B, H), jnp.float32)
            h_fin, c_fin = jax.lax.fori_loop(0, S, step, (h0, c0), unroll=unroll)

            # Final states written exactly once per layer.
            hidden_ref[l] = h_fin
            cell_ref[l] = c_fin

            if not last_layer:
                x_in = hseq_scr[...]                                      # (SB, H)

    return kernel


def _reorder_gates(w, axis=0):
    """PyTorch LSTM gate order [i, f, g, o] -> kernel order [i, f, o, g]."""
    i, f, g, o = jnp.split(w, 4, axis=axis)
    return jnp.concatenate([i, f, o, g], axis=axis)


@jax.jit
def encoder_forward(params, x_tokens):
    """x_tokens: (S, B) int32 token ids -> (hidden, cell), each (num_layers, B, H)."""
    S, B = x_tokens.shape
    emb_table = params["embedding"].astype(jnp.float32)                  # (V, E)
    V, E = emb_table.shape
    layers = params["layers"]
    num_layers = len(layers)
    H = layers[0]["w_hh"].shape[1]

    # Pad batch to the sublane grain (8) and vocab to the lane grain (128).
    B_pad = ((B + 7) // 8) * 8
    V_pad = ((V + 127) // 128) * 128
    ids = jnp.pad(x_tokens.astype(jnp.int32), ((0, 0), (0, B_pad - B)))
    ids = ids.reshape(S * B_pad, 1)
    emb_pad = jnp.pad(emb_table, ((0, V_pad - V), (0, 0)))

    in_specs = [
        pl.BlockSpec((S * B_pad, 1), lambda i: (0, 0)),                  # token ids
        pl.BlockSpec((V_pad, E), lambda i: (0, 0)),                      # embedding table
    ]
    inputs = [ids, emb_pad]
    for lp in layers:
        wih_t = jnp.transpose(_reorder_gates(lp["w_ih"].astype(jnp.float32)))   # (in, 4H)
        whh_t = jnp.transpose(_reorder_gates(lp["w_hh"].astype(jnp.float32)))   # (H, 4H)
        b = _reorder_gates((lp["b_ih"] + lp["b_hh"]).astype(jnp.float32)
                           ).reshape(1, 4 * H)
        in_dim = wih_t.shape[0]
        in_specs += [pl.BlockSpec((in_dim, 4 * H), lambda i: (0, 0)),
                     pl.BlockSpec((H, 4 * H), lambda i: (0, 0)),
                     pl.BlockSpec((1, 4 * H), lambda i: (0, 0))]
        inputs += [wih_t, whh_t, b]

    scratch_shapes = [pltpu.VMEM((S * B_pad, 4 * H), jnp.float32)]       # x_proj
    if num_layers > 1:
        scratch_shapes.append(pltpu.VMEM((S * B_pad, H), jnp.float32))   # h sequence

    hidden, cell = pl.pallas_call(
        make_encoder_kernel(S, B_pad, H, V_pad, E, num_layers),
        out_shape=(jax.ShapeDtypeStruct((num_layers, B_pad, H), jnp.float32),
                   jax.ShapeDtypeStruct((num_layers, B_pad, H), jnp.float32)),
        grid_spec=pltpu.PrefetchScalarGridSpec(
            num_scalar_prefetch=0,
            grid=(1,),                    # single invocation; loops run in-kernel
            in_specs=in_specs,
            out_specs=[pl.BlockSpec((num_layers, B_pad, H), lambda i: (0, 0, 0)),
                       pl.BlockSpec((num_layers, B_pad, H), lambda i: (0, 0, 0))],
            scratch_shapes=scratch_shapes,
        ),
        compiler_params=pltpu.CompilerParams(
            # Serial recurrence: no parallel grid axis.  If batch grows >=16 on
            # v7x, add a leading "parallel" batch-halves axis to use both TCs.
            dimension_semantics=("arbitrary",),
        ),
    )(*inputs)

    return hidden[:, :B, :], cell[:, :B, :]


def init_encoder_params(key, input_size, embedding_size, hidden_size, num_layers):
    """Deterministic parameter init (same shapes as the PyTorch module)."""
    keys = jax.random.split(key, 1 + 4 * num_layers)
    params = {"embedding": jax.random.normal(
        keys[0], (input_size, embedding_size), jnp.float32)}
    bound = 1.0 / jnp.sqrt(hidden_size)
    layers = []
    for layer in range(num_layers):
        in_dim = embedding_size if layer == 0 else hidden_size
        k = keys[1 + 4 * layer: 1 + 4 * (layer + 1)]
        layers.append({
            "w_ih": jax.random.uniform(k[0], (4 * hidden_size, in_dim),
                                       jnp.float32, -bound, bound),
            "w_hh": jax.random.uniform(k[1], (4 * hidden_size, hidden_size),
                                       jnp.float32, -bound, bound),
            "b_ih": jax.random.uniform(k[2], (4 * hidden_size,),
                                       jnp.float32, -bound, bound),
            "b_hh": jax.random.uniform(k[3], (4 * hidden_size,),
                                       jnp.float32, -bound, bound),
        })
    params["layers"] = layers
    return params


def encoder_reference(params, x_tokens):
    """Pure-JAX reference (eval-mode dropout = identity), PyTorch gate order."""
    emb = jnp.take(params["embedding"].astype(jnp.float32), x_tokens, axis=0)
    S, B, _ = emb.shape
    hiddens, cells = [], []
    layer_in = emb
    for lp in params["layers"]:
        H = lp["w_hh"].shape[1]
        wih_t = jnp.transpose(lp["w_ih"]).astype(jnp.float32)
        whh_t = jnp.transpose(lp["w_hh"]).astype(jnp.float32)
        b = (lp["b_ih"] + lp["b_hh"]).astype(jnp.float32)
        h = jnp.zeros((B, H), jnp.float32)
        c = jnp.zeros((B, H), jnp.float32)
        outs = []
        for t in range(S):
            g = layer_in[t] @ wih_t + h @ whh_t + b
            i_g = jax.nn.sigmoid(g[:, :H])
            f_g = jax.nn.sigmoid(g[:, H:2 * H])
            g_g = jnp.tanh(g[:, 2 * H:3 * H])
            o_g = jax.nn.sigmoid(g[:, 3 * H:])
            c = f_g * c + i_g * g_g
            h = o_g * jnp.tanh(c)
            outs.append(h)
        layer_in = jnp.stack(outs, axis=0)
        hiddens.append(h)
        cells.append(c)
    return jnp.stack(hiddens, axis=0), jnp.stack(cells, axis=0)


if __name__ == "__main__":
    # Small shapes consistent with the module.
    input_size = 50       # vocab
    embedding_size = 32
    hidden_size = 32
    num_layers = 2
    seq_len = 8
    batch = 4

    key = jax.random.PRNGKey(0)
    kparam, kdata = jax.random.split(key)
    params = init_encoder_params(kparam, input_size, embedding_size,
                                 hidden_size, num_layers)
    x_tokens = jax.random.randint(kdata, (seq_len, batch), 0, input_size,
                                  dtype=jnp.int32)

    hidden, cell = encoder_forward(params, x_tokens)
    jax.block_until_ready((hidden, cell))

    assert hidden.shape == (num_layers, batch, hidden_size)
    assert cell.shape == (num_layers, batch, hidden_size)

    h_ref, c_ref = encoder_reference(params, x_tokens)
    assert jnp.allclose(hidden, h_ref, atol=1e-3, rtol=1e-3), \
        float(jnp.max(jnp.abs(hidden - h_ref)))
    assert jnp.allclose(cell, c_ref, atol=1e-3, rtol=1e-3), \
        float(jnp.max(jnp.abs(cell - c_ref)))

    print("KERNEL_OK")
</pallas_src>

<mosaic_0001>
module attributes {stable_mosaic.version = 11 : i64} {
  func.func @kernel(%arg0: i32, %arg1: memref<64x1xi32, #tpu.memory_space<vmem>>, %arg2: memref<128x32xf32, #tpu.memory_space<vmem>>, %arg3: memref<32x128xf32, #tpu.memory_space<vmem>>, %arg4: memref<32x128xf32, #tpu.memory_space<vmem>>, %arg5: memref<1x128xf32, #tpu.memory_space<vmem>>, %arg6: memref<32x128xf32, #tpu.memory_space<vmem>>, %arg7: memref<32x128xf32, #tpu.memory_space<vmem>>, %arg8: memref<1x128xf32, #tpu.memory_space<vmem>>, %arg9: memref<2x8x32xf32, #tpu.memory_space<vmem>>, %arg10: memref<2x8x32xf32, #tpu.memory_space<vmem>>, %arg11: memref<64x128xf32, #tpu.memory_space<vmem>>, %arg12: memref<64x32xf32, #tpu.memory_space<vmem>>) attributes {dimension_semantics = [#tpu.dimension_semantics<arbitrary>], iteration_bounds = array<i64: 1>, scalar_prefetch = 0 : i64, scratch_operands = 2 : i64, tpu.core_type = #tpu.core_type<tc>, window_params = [{pipeline_mode = #tpu.pipeline_mode<synchronous>, transform_indices = @transform_0, window_bounds = array<i64: 64, 1>}, {pipeline_mode = #tpu.pipeline_mode<synchronous>, transform_indices = @transform_1, window_bounds = array<i64: 128, 32>}, {pipeline_mode = #tpu.pipeline_mode<synchronous>, transform_indices = @transform_2, window_bounds = array<i64: 32, 128>}, {pipeline_mode = #tpu.pipeline_mode<synchronous>, transform_indices = @transform_3, window_bounds = array<i64: 32, 128>}, {pipeline_mode = #tpu.pipeline_mode<synchronous>, transform_indices = @transform_4, window_bounds = array<i64: 1, 128>}, {pipeline_mode = #tpu.pipeline_mode<synchronous>, transform_indices = @transform_5, window_bounds = array<i64: 32, 128>}, {pipeline_mode = #tpu.pipeline_mode<synchronous>, transform_indices = @transform_6, window_bounds = array<i64: 32, 128>}, {pipeline_mode = #tpu.pipeline_mode<synchronous>, transform_indices = @transform_7, window_bounds = array<i64: 1, 128>}, {pipeline_mode = #tpu.pipeline_mode<synchronous>, transform_indices = @transform_8, window_bounds = array<i64: 2, 8, 32>}, {pipeline_mode = #tpu.pipeline_mode<synchronous>, transform_indices = @transform_9, window_bounds = array<i64: 2, 8, 32>}]} {
    %0 = tpu.iota {dimensions = array<i32: 1>} : vector<64x128xi32>
    %c0 = arith.constant 0 : index
    %c0_0 = arith.constant 0 : index
    %1 = vector.load %arg1[%c0, %c0_0] : memref<64x1xi32, #tpu.memory_space<vmem>>, vector<64x1xi32>
    %2 = vector.broadcast %1 : vector<64x1xi32> to vector<64x128xi32>
    %3 = arith.cmpi eq, %0, %2 : vector<64x128xi32>
    %4 = arith.extui %3 : vector<64x128xi1> to vector<64x128xi32>
    %5 = arith.sitofp %4 : vector<64x128xi32> to vector<64x128xf32>
    %c0_1 = arith.constant 0 : index
    %c0_2 = arith.constant 0 : index
    %6 = vector.load %arg2[%c0_1, %c0_2] : memref<128x32xf32, #tpu.memory_space<vmem>>, vector<128x32xf32>
    %cst = arith.constant dense<0.000000e+00> : vector<64x32xf32>
    %7 = tpu.matmul %5, %6, %cst {dimension_numbers = #tpu.dot_dimension_numbers<[1], [0], [0], [1], [0, 0, 1, 1], [], []>} : vector<64x128xf32>, vector<128x32xf32>, vector<64x32xf32> -> vector<64x32xf32>
    %c0_3 = arith.constant 0 : index
    %c0_4 = arith.constant 0 : index
    %8 = vector.load %arg3[%c0_3, %c0_4] : memref<32x128xf32, #tpu.memory_space<vmem>>, vector<32x128xf32>
    %cst_5 = arith.constant dense<0.000000e+00> : vector<64x128xf32>
    %9 = tpu.matmul %7, %8, %cst_5 {dimension_numbers = #tpu.dot_dimension_numbers<[1], [0], [0], [1], [0, 0, 1, 1], [], []>} : vector<64x32xf32>, vector<32x128xf32>, vector<64x128xf32> -> vector<64x128xf32>
    %c0_6 = arith.constant 0 : index
    %c0_7 = arith.constant 0 : index
    %10 = vector.load %arg5[%c0_6, %c0_7] : memref<1x128xf32, #tpu.memory_space<vmem>>, vector<1x128xf32>
    %11 = vector.broadcast %10 : vector<1x128xf32> to vector<64x128xf32>
    %12 = arith.addf %9, %11 : vector<64x128xf32>
    %c0_8 = arith.constant 0 : index
    %c0_9 = arith.constant 0 : index
    %13 = vector.load %arg11[%c0_8, %c0_9] : memref<64x128xf32, #tpu.memory_space<vmem>>, vector<64x128xf32>
    tpu.vector_store %arg11[%c0_8, %c0_9], %12 {strides = array<i32>} : memref<64x128xf32, #tpu.memory_space<vmem>>, vector<64x128xf32>,
    %c0_10 = arith.constant 0 : index
    %c0_11 = arith.constant 0 : index
    %14 = vector.load %arg4[%c0_10, %c0_11] : memref<32x128xf32, #tpu.memory_space<vmem>>, vector<32x128xf32>
    %cst_12 = arith.constant 0.000000e+00 : f32
    %15 = vector.broadcast %cst_12 : f32 to vector<8x32xf32>
    %cst_13 = arith.constant 0.000000e+00 : f32
    %16 = vector.broadcast %cst_13 : f32 to vector<8x32xf32>
    %c0_i32 = arith.constant 0 : i32
    %c8_i32 = arith.constant 8 : i32
    %17 = arith.muli %c0_i32, %c8_i32 : i32
    %18 = tpu.assume_multiple %17, 8 : i32
    %19 = arith.index_cast %18 : i32 to index
    %c0_14 = arith.constant 0 : index
    %20 = vector.load %arg11[%19, %c0_14] : memref<64x128xf32, #tpu.memory_space<vmem>>, vector<8x128xf32>
    %cst_15 = arith.constant dense<0.000000e+00> : vector<8x128xf32>
    %21 = tpu.matmul %15, %14, %cst_15 {dimension_numbers = #tpu.dot_dimension_numbers<[1], [0], [0], [1], [0, 0, 1, 1], [], []>} : vector<8x32xf32>, vector<32x128xf32>, vector<8x128xf32> -> vector<8x128xf32>
    %22 = arith.addf %20, %21 : vector<8x128xf32>
    %23 = vector.extract_strided_slice %22 {offsets = [0, 0], sizes = [8, 96], strides = [1, 1]} : vector<8x128xf32> to vector<8x96xf32>
    %24 = arith.negf %23 : vector<8x96xf32>
    %25 = math.exp %24 : vector<8x96xf32>
    %cst_16 = arith.constant 1.000000e+00 : f32
    %26 = vector.broadcast %cst_16 : f32 to vector<8x96xf32>
    %27 = arith.addf %26, %25 : vector<8x96xf32>
    %28 = arith.divf %26, %27 : vector<8x96xf32>
    %29 = vector.extract_strided_slice %22 {offsets = [0, 96], sizes = [8, 32], strides = [1, 1]} : vector<8x128xf32> to vector<8x32xf32>
    %30 = math.tanh %29 : vector<8x32xf32>
    %31 = vector.extract_strided_slice %28 {offsets = [0, 0], sizes = [8, 32], strides = [1, 1]} : vector<8x96xf32> to vector<8x32xf32>
    %32 = vector.extract_strided_slice %28 {offsets = [0, 32], sizes = [8, 32], strides = [1, 1]} : vector<8x96xf32> to vector<8x32xf32>
    %33 = vector.extract_strided_slice %28 {offsets = [0, 64], sizes = [8, 32], strides = [1, 1]} : vector<8x96xf32> to vector<8x32xf32>
    %34 = arith.mulf %32, %16 : vector<8x32xf32>
    %35 = arith.mulf %31, %30 : vector<8x32xf32>
    %36 = arith.addf %34, %35 : vector<8x32xf32>
    %37 = math.tanh %36 : vector<8x32xf32>
    %38 = arith.mulf %33, %37 : vector<8x32xf32>
    %39 = arith.index_cast %18 : i32 to index
    %c0_17 = arith.constant 0 : index
    %40 = vector.load %arg12[%39, %c0_17] : memref<64x32xf32, #tpu.memory_space<vmem>>, vector<8x32xf32>
    tpu.vector_store %arg12[%39, %c0_17], %38 {strides = array<i32>} : memref<64x32xf32, #tpu.memory_space<vmem>>, vector<8x32xf32>,
    %c1_i32 = arith.constant 1 : i32
    %c8_i32_18 = arith.constant 8 : i32
    %41 = arith.muli %c1_i32, %c8_i32_18 : i32
    %42 = tpu.assume_multiple %41, 8 : i32
    %43 = arith.index_cast %42 : i32 to index
    %c0_19 = arith.constant 0 : index
    %44 = vector.load %arg11[%43, %c0_19] : memref<64x128xf32, #tpu.memory_space<vmem>>, vector<8x128xf32>
    %cst_20 = arith.constant dense<0.000000e+00> : vector<8x128xf32>
    %45 = tpu.matmul %38, %14, %cst_20 {dimension_numbers = #tpu.dot_dimension_numbers<[1], [0], [0], [1], [0, 0, 1, 1], [], []>} : vector<8x32xf32>, vector<32x128xf32>, vector<8x128xf32> -> vector<8x128xf32>
    %46 = arith.addf %44, %45 : vector<8x128xf32>
    %47 = vector.extract_strided_slice %46 {offsets = [0, 0], sizes = [8, 96], strides = [1, 1]} : vector<8x128xf32> to vector<8x96xf32>
    %48 = arith.negf %47 : vector<8x96xf32>
    %49 = math.exp %48 : vector<8x96xf32>
    %cst_21 = arith.constant 1.000000e+00 : f32
    %50 = vector.broadcast %cst_21 : f32 to vector<8x96xf32>
    %51 = arith.addf %50, %49 : vector<8x96xf32>
    %52 = arith.divf %50, %51 : vector<8x96xf32>
    %53 = vector.extract_strided_slice %46 {offsets = [0, 96], sizes = [8, 32], strides = [1, 1]} : vector<8x128xf32> to vector<8x32xf32>
    %54 = math.tanh %53 : vector<8x32xf32>
    %55 = vector.extract_strided_slice %52 {offsets = [0, 0], sizes = [8, 32], strides = [1, 1]} : vector<8x96xf32> to vector<8x32xf32>
    %56 = vector.extract_strided_slice %52 {offsets = [0, 32], sizes = [8, 32], strides = [1, 1]} : vector<8x96xf32> to vector<8x32xf32>
    %57 = vector.extract_strided_slice %52 {offsets = [0, 64], sizes = [8, 32], strides = [1, 1]} : vector<8x96xf32> to vector<8x32xf32>
    %58 = arith.mulf %56, %36 : vector<8x32xf32>
    %59 = arith.mulf %55, %54 : vector<8x32xf32>
    %60 = arith.addf %58, %59 : vector<8x32xf32>
    %61 = math.tanh %60 : vector<8x32xf32>
    %62 = arith.mulf %57, %61 : vector<8x32xf32>
    %63 = arith.index_cast %42 : i32 to index
    %c0_22 = arith.constant 0 : index
    %64 = vector.load %arg12[%63, %c0_22] : memref<64x32xf32, #tpu.memory_space<vmem>>, vector<8x32xf32>
    tpu.vector_store %arg12[%63, %c0_22], %62 {strides = array<i32>} : memref<64x32xf32, #tpu.memory_space<vmem>>, vector<8x32xf32>,
    %c2_i32 = arith.constant 2 : i32
    %c8_i32_23 = arith.constant 8 : i32
    %65 = arith.muli %c2_i32, %c8_i32_23 : i32
    %66 = tpu.assume_multiple %65, 8 : i32
    %67 = arith.index_cast %66 : i32 to index
    %c0_24 = arith.constant 0 : index
    %68 = vector.load %arg11[%67, %c0_24] : memref<64x128xf32, #tpu.memory_space<vmem>>, vector<8x128xf32>
    %cst_25 = arith.constant dense<0.000000e+00> : vector<8x128xf32>
    %69 = tpu.matmul %62, %14, %cst_25 {dimension_numbers = #tpu.dot_dimension_numbers<[1], [0], [0], [1], [0, 0, 1, 1], [], []>} : vector<8x32xf32>, vector<32x128xf32>, vector<8x128xf32> -> vector<8x128xf32>
    %70 = arith.addf %68, %69 : vector<8x128xf32>
    %71 = vector.extract_strided_slice %70 {offsets = [0, 0], sizes = [8, 96], strides = [1, 1]} : vector<8x128xf32> to vector<8x96xf32>
    %72 = arith.negf %71 : vector<8x96xf32>
    %73 = math.exp %72 : vector<8x96xf32>
    %cst_26 = arith.constant 1.000000e+00 : f32
    %74 = vector.broadcast %cst_26 : f32 to vector<8x96xf32>
    %75 = arith.addf %74, %73 : vector<8x96xf32>
    %76 = arith.divf %74, %75 : vector<8x96xf32>
    %77 = vector.extract_strided_slice %70 {offsets = [0, 96], sizes = [8, 32], strides = [1, 1]} : vector<8x128xf32> to vector<8x32xf32>
    %78 = math.tanh %77 : vector<8x32xf32>
    %79 = vector.extract_strided_slice %76 {offsets = [0, 0], sizes = [8, 32], strides = [1, 1]} : vector<8x96xf32> to vector<8x32xf32>
    %80 = vector.extract_strided_slice %76 {offsets = [0, 32], sizes = [8, 32], strides = [1, 1]} : vector<8x96xf32> to vector<8x32xf32>
    %81 = vector.extract_strided_slice %76 {offsets = [0, 64], sizes = [8, 32], strides = [1, 1]} : vector<8x96xf32> to vector<8x32xf32>
    %82 = arith.mulf %80, %60 : vector<8x32xf32>
    %83 = arith.mulf %79, %78 : vector<8x32xf32>
    %84 = arith.addf %82, %83 : vector<8x32xf32>
    %85 = math.tanh %84 : vector<8x32xf32>
    %86 = arith.mulf %81, %85 : vector<8x32xf32>
    %87 = arith.index_cast %66 : i32 to index
    %c0_27 = arith.constant 0 : index
    %88 = vector.load %arg12[%87, %c0_27] : memref<64x32xf32, #tpu.memory_space<vmem>>, vector<8x32xf32>
    tpu.vector_store %arg12[%87, %c0_27], %86 {strides = array<i32>} : memref<64x32xf32, #tpu.memory_space<vmem>>, vector<8x32xf32>,
    %c3_i32 = arith.constant 3 : i32
    %c8_i32_28 = arith.constant 8 : i32
    %89 = arith.muli %c3_i32, %c8_i32_28 : i32
    %90 = tpu.assume_multiple %89, 8 : i32
    %91 = arith.index_cast %90 : i32 to index
    %c0_29 = arith.constant 0 : index
    %92 = vector.load %arg11[%91, %c0_29] : memref<64x128xf32, #tpu.memory_space<vmem>>, vector<8x128xf32>
    %cst_30 = arith.constant dense<0.000000e+00> : vector<8x128xf32>
    %93 = tpu.matmul %86, %14, %cst_30 {dimension_numbers = #tpu.dot_dimension_numbers<[1], [0], [0], [1], [0, 0, 1, 1], [], []>} : vector<8x32xf32>, vector<32x128xf32>, vector<8x128xf32> -> vector<8x128xf32>
    %94 = arith.addf %92, %93 : vector<8x128xf32>
    %95 = vector.extract_strided_slice %94 {offsets = [0, 0], sizes = [8, 96], strides = [1, 1]} : vector<8x128xf32> to vector<8x96xf32>
    %96 = arith.negf %95 : vector<8x96xf32>
    %97 = math.exp %96 : vector<8x96xf32>
    %cst_31 = arith.constant 1.000000e+00 : f32
    %98 = vector.broadcast %cst_31 : f32 to vector<8x96xf32>
    %99 = arith.addf %98, %97 : vector<8x96xf32>
    %100 = arith.divf %98, %99 : vector<8x96xf32>
    %101 = vector.extract_strided_slice %94 {offsets = [0, 96], sizes = [8, 32], strides = [1, 1]} : vector<8x128xf32> to vector<8x32xf32>
    %102 = math.tanh %101 : vector<8x32xf32>
    %103 = vector.extract_strided_slice %100 {offsets = [0, 0], sizes = [8, 32], strides = [1, 1]} : vector<8x96xf32> to vector<8x32xf32>
    %104 = vector.extract_strided_slice %100 {offsets = [0, 32], sizes = [8, 32], strides = [1, 1]} : vector<8x96xf32> to vector<8x32xf32>
    %105 = vector.extract_strided_slice %100 {offsets = [0, 64], sizes = [8, 32], strides = [1, 1]} : vector<8x96xf32> to vector<8x32xf32>
    %106 = arith.mulf %104, %84 : vector<8x32xf32>
    %107 = arith.mulf %103, %102 : vector<8x32xf32>
    %108 = arith.addf %106, %107 : vector<8x32xf32>
    %109 = math.tanh %108 : vector<8x32xf32>
    %110 = arith.mulf %105, %109 : vector<8x32xf32>
    %111 = arith.index_cast %90 : i32 to index
    %c0_32 = arith.constant 0 : index
    %112 = vector.load %arg12[%111, %c0_32] : memref<64x32xf32, #tpu.memory_space<vmem>>, vector<8x32xf32>
    tpu.vector_store %arg12[%111, %c0_32], %110 {strides = array<i32>} : memref<64x32xf32, #tpu.memory_space<vmem>>, vector<8x32xf32>,
    %c4_i32 = arith.constant 4 : i32
    %c8_i32_33 = arith.constant 8 : i32
    %113 = arith.muli %c4_i32, %c8_i32_33 : i32
    %114 = tpu.assume_multiple %113, 8 : i32
    %115 = arith.index_cast %114 : i32 to index
    %c0_34 = arith.constant 0 : index
    %116 = vector.load %arg11[%115, %c0_34] : memref<64x128xf32, #tpu.memory_space<vmem>>, vector<8x128xf32>
    %cst_35 = arith.constant dense<0.000000e+00> : vector<8x128xf32>
    %117 = tpu.matmul %110, %14, %cst_35 {dimension_numbers = #tpu.dot_dimension_numbers<[1], [0], [0], [1], [0, 0, 1, 1], [], []>} : vector<8x32xf32>, vector<32x128xf32>, vector<8x128xf32> -> vector<8x128xf32>
    %118 = arith.addf %116, %117 : vector<8x128xf32>
    %119 = vector.extract_strided_slice %118 {offsets = [0, 0], sizes = [8, 96], strides = [1, 1]} : vector<8x128xf32> to vector<8x96xf32>
    %120 = arith.negf %119 : vector<8x96xf32>
    %121 = math.exp %120 : vector<8x96xf32>
    %cst_36 = arith.constant 1.000000e+00 : f32
    %122 = vector.broadcast %cst_36 : f32 to vector<8x96xf32>
    %123 = arith.addf %122, %121 : vector<8x96xf32>
    %124 = arith.divf %122, %123 : vector<8x96xf32>
    %125 = vector.extract_strided_slice %118 {offsets = [0, 96], sizes = [8, 32], strides = [1, 1]} : vector<8x128xf32> to vector<8x32xf32>
    %126 = math.tanh %125 : vector<8x32xf32>
    %127 = vector.extract_strided_slice %124 {offsets = [0, 0], sizes = [8, 32], strides = [1, 1]} : vector<8x96xf32> to vector<8x32xf32>
    %128 = vector.extract_strided_slice %124 {offsets = [0, 32], sizes = [8, 32], strides = [1, 1]} : vector<8x96xf32> to vector<8x32xf32>
    %129 = vector.extract_strided_slice %124 {offsets = [0, 64], sizes = [8, 32], strides = [1, 1]} : vector<8x96xf32> to vector<8x32xf32>
    %130 = arith.mulf %128, %108 : vector<8x32xf32>
    %131 = arith.mulf %127, %126 : vector<8x32xf32>
    %132 = arith.addf %130, %131 : vector<8x32xf32>
    %133 = math.tanh %132 : vector<8x32xf32>
    %134 = arith.mulf %129, %133 : vector<8x32xf32>
    %135 = arith.index_cast %114 : i32 to index
    %c0_37 = arith.constant 0 : index
    %136 = vector.load %arg12[%135, %c0_37] : memref<64x32xf32, #tpu.memory_space<vmem>>, vector<8x32xf32>
    tpu.vector_store %arg12[%135, %c0_37], %134 {strides = array<i32>} : memref<64x32xf32, #tpu.memory_space<vmem>>, vector<8x32xf32>,
    %c5_i32 = arith.constant 5 : i32
    %c8_i32_38 = arith.constant 8 : i32
    %137 = arith.muli %c5_i32, %c8_i32_38 : i32
    %138 = tpu.assume_multiple %137, 8 : i32
    %139 = arith.index_cast %138 : i32 to index
    %c0_39 = arith.constant 0 : index
    %140 = vector.load %arg11[%139, %c0_39] : memref<64x128xf32, #tpu.memory_space<vmem>>, vector<8x128xf32>
    %cst_40 = arith.constant dense<0.000000e+00> : vector<8x128xf32>
    %141 = tpu.matmul %134, %14, %cst_40 {dimension_numbers = #tpu.dot_dimension_numbers<[1], [0], [0], [1], [0, 0, 1, 1], [], []>} : vector<8x32xf32>, vector<32x128xf32>, vector<8x128xf32> -> vector<8x128xf32>
    %142 = arith.addf %140, %141 : vector<8x128xf32>
    %143 = vector.extract_strided_slice %142 {offsets = [0, 0], sizes = [8, 96], strides = [1, 1]} : vector<8x128xf32> to vector<8x96xf32>
    %144 = arith.negf %143 : vector<8x96xf32>
    %145 = math.exp %144 : vector<8x96xf32>
    %cst_41 = arith.constant 1.000000e+00 : f32
    %146 = vector.broadcast %cst_41 : f32 to vector<8x96xf32>
    %147 = arith.addf %146, %145 : vector<8x96xf32>
    %148 = arith.divf %146, %147 : vector<8x96xf32>
    %149 = vector.extract_strided_slice %142 {offsets = [0, 96], sizes = [8, 32], strides = [1, 1]} : vector<8x128xf32> to vector<8x32xf32>
    %150 = math.tanh %149 : vector<8x32xf32>
    %151 = vector.extract_strided_slice %148 {offsets = [0, 0], sizes = [8, 32], strides = [1, 1]} : vector<8x96xf32> to vector<8x32xf32>
    %152 = vector.extract_strided_slice %148 {offsets = [0, 32], sizes = [8, 32], strides = [1, 1]} : vector<8x96xf32> to vector<8x32xf32>
    %153 = vector.extract_strided_slice %148 {offsets = [0, 64], sizes = [8, 32], strides = [1, 1]} : vector<8x96xf32> to vector<8x32xf32>
    %154 = arith.mulf %152, %132 : vector<8x32xf32>
    %155 = arith.mulf %151, %150 : vector<8x32xf32>
    %156 = arith.addf %154, %155 : vector<8x32xf32>
    %157 = math.tanh %156 : vector<8x32xf32>
    %158 = arith.mulf %153, %157 : vector<8x32xf32>
    %159 = arith.index_cast %138 : i32 to index
    %c0_42 = arith.constant 0 : index
    %160 = vector.load %arg12[%159, %c0_42] : memref<64x32xf32, #tpu.memory_space<vmem>>, vector<8x32xf32>
    tpu.vector_store %arg12[%159, %c0_42], %158 {strides = array<i32>} : memref<64x32xf32, #tpu.memory_space<vmem>>, vector<8x32xf32>,
    %c6_i32 = arith.constant 6 : i32
    %c8_i32_43 = arith.constant 8 : i32
    %161 = arith.muli %c6_i32, %c8_i32_43 : i32
    %162 = tpu.assume_multiple %161, 8 : i32
    %163 = arith.index_cast %162 : i32 to index
    %c0_44 = arith.constant 0 : index
    %164 = vector.load %arg11[%163, %c0_44] : memref<64x128xf32, #tpu.memory_space<vmem>>, vector<8x128xf32>
    %cst_45 = arith.constant dense<0.000000e+00> : vector<8x128xf32>
    %165 = tpu.matmul %158, %14, %cst_45 {dimension_numbers = #tpu.dot_dimension_numbers<[1], [0], [0], [1], [0, 0, 1, 1], [], []>} : vector<8x32xf32>, vector<32x128xf32>, vector<8x128xf32> -> vector<8x128xf32>
    %166 = arith.addf %164, %165 : vector<8x128xf32>
    %167 = vector.extract_strided_slice %166 {offsets = [0, 0], sizes = [8, 96], strides = [1, 1]} : vector<8x128xf32> to vector<8x96xf32>
    %168 = arith.negf %167 : vector<8x96xf32>
    %169 = math.exp %168 : vector<8x96xf32>
    %cst_46 = arith.constant 1.000000e+00 : f32
    %170 = vector.broadcast %cst_46 : f32 to vector<8x96xf32>
    %171 = arith.addf %170, %169 : vector<8x96xf32>
    %172 = arith.divf %170, %171 : vector<8x96xf32>
    %173 = vector.extract_strided_slice %166 {offsets = [0, 96], sizes = [8, 32], strides = [1, 1]} : vector<8x128xf32> to vector<8x32xf32>
    %174 = math.tanh %173 : vector<8x32xf32>
    %175 = vector.extract_strided_slice %172 {offsets = [0, 0], sizes = [8, 32], strides = [1, 1]} : vector<8x96xf32> to vector<8x32xf32>
    %176 = vector.extract_strided_slice %172 {offsets = [0, 32], sizes = [8, 32], strides = [1, 1]} : vector<8x96xf32> to vector<8x32xf32>
    %177 = vector.extract_strided_slice %172 {offsets = [0, 64], sizes = [8, 32], strides = [1, 1]} : vector<8x96xf32> to vector<8x32xf32>
    %178 = arith.mulf %176, %156 : vector<8x32xf32>
    %179 = arith.mulf %175, %174 : vector<8x32xf32>
    %180 = arith.addf %178, %179 : vector<8x32xf32>
    %181 = math.tanh %180 : vector<8x32xf32>
    %182 = arith.mulf %177, %181 : vector<8x32xf32>
    %183 = arith.index_cast %162 : i32 to index
    %c0_47 = arith.constant 0 : index
    %184 = vector.load %arg12[%183, %c0_47] : memref<64x32xf32, #tpu.memory_space<vmem>>, vector<8x32xf32>
    tpu.vector_store %arg12[%183, %c0_47], %182 {strides = array<i32>} : memref<64x32xf32, #tpu.memory_space<vmem>>, vector<8x32xf32>,
    %c7_i32 = arith.constant 7 : i32
    %c8_i32_48 = arith.constant 8 : i32
    %185 = arith.muli %c7_i32, %c8_i32_48 : i32
    %186 = tpu.assume_multiple %185, 8 : i32
    %187 = arith.index_cast %186 : i32 to index
    %c0_49 = arith.constant 0 : index
    %188 = vector.load %arg11[%187, %c0_49] : memref<64x128xf32, #tpu.memory_space<vmem>>, vector<8x128xf32>
    %cst_50 = arith.constant dense<0.000000e+00> : vector<8x128xf32>
    %189 = tpu.matmul %182, %14, %cst_50 {dimension_numbers = #tpu.dot_dimension_numbers<[1], [0], [0], [1], [0, 0, 1, 1], [], []>} : vector<8x32xf32>, vector<32x128xf32>, vector<8x128xf32> -> vector<8x128xf32>
    %190 = arith.addf %188, %189 : vector<8x128xf32>
    %191 = vector.extract_strided_slice %190 {offsets = [0, 0], sizes = [8, 96], strides = [1, 1]} : vector<8x128xf32> to vector<8x96xf32>
    %192 = arith.negf %191 : vector<8x96xf32>
    %193 = math.exp %192 : vector<8x96xf32>
    %cst_51 = arith.constant 1.000000e+00 : f32
    %194 = vector.broadcast %cst_51 : f32 to vector<8x96xf32>
    %195 = arith.addf %194, %193 : vector<8x96xf32>
    %196 = arith.divf %194, %195 : vector<8x96xf32>
    %197 = vector.extract_strided_slice %190 {offsets = [0, 96], sizes = [8, 32], strides = [1, 1]} : vector<8x128xf32> to vector<8x32xf32>
    %198 = math.tanh %197 : vector<8x32xf32>
    %199 = vector.extract_strided_slice %196 {offsets = [0, 0], sizes = [8, 32], strides = [1, 1]} : vector<8x96xf32> to vector<8x32xf32>
    %200 = vector.extract_strided_slice %196 {offsets = [0, 32], sizes = [8, 32], strides = [1, 1]} : vector<8x96xf32> to vector<8x32xf32>
    %201 = vector.extract_strided_slice %196 {offsets = [0, 64], sizes = [8, 32], strides = [1, 1]} : vector<8x96xf32> to vector<8x32xf32>
    %202 = arith.mulf %200, %180 : vector<8x32xf32>
    %203 = arith.mulf %199, %198 : vector<8x32xf32>
    %204 = arith.addf %202, %203 : vector<8x32xf32>
    %205 = math.tanh %204 : vector<8x32xf32>
    %206 = arith.mulf %201, %205 : vector<8x32xf32>
    %207 = arith.index_cast %186 : i32 to index
    %c0_52 = arith.constant 0 : index
    %208 = vector.load %arg12[%207, %c0_52] : memref<64x32xf32, #tpu.memory_space<vmem>>, vector<8x32xf32>
    tpu.vector_store %arg12[%207, %c0_52], %206 {strides = array<i32>} : memref<64x32xf32, #tpu.memory_space<vmem>>, vector<8x32xf32>,
    %c8_i32_53 = arith.constant 8 : i32
    %c0_54 = arith.constant 0 : index
    %c0_55 = arith.constant 0 : index
    %c0_56 = arith.constant 0 : index
    %209 = vector.load %arg9[%c0_54, %c0_55, %c0_56] : memref<2x8x32xf32, #tpu.memory_space<vmem>>, vector<1x8x32xf32>
    %210 = vector.shape_cast %209 : vector<1x8x32xf32> to vector<8x32xf32>
    %211 = vector.shape_cast %206 : vector<8x32xf32> to vector<1x8x32xf32>
    tpu.vector_store %arg9[%c0_54, %c0_55, %c0_56], %211 {strides = array<i32>} : memref<2x8x32xf32, #tpu.memory_space<vmem>>, vector<1x8x32xf32>,
    %c0_57 = arith.constant 0 : index
    %c0_58 = arith.constant 0 : index
    %c0_59 = arith.constant 0 : index
    %212 = vector.load %arg10[%c0_57, %c0_58, %c0_59] : memref<2x8x32xf32, #tpu.memory_space<vmem>>, vector<1x8x32xf32>
    %213 = vector.shape_cast %212 : vector<1x8x32xf32> to vector<8x32xf32>
    %214 = vector.shape_cast %204 : vector<8x32xf32> to vector<1x8x32xf32>
    tpu.vector_store %arg10[%c0_57, %c0_58, %c0_59], %214 {strides = array<i32>} : memref<2x8x32xf32, #tpu.memory_space<vmem>>, vector<1x8x32xf32>,
    %c0_60 = arith.constant 0 : index
    %c0_61 = arith.constant 0 : index
    %215 = vector.load %arg12[%c0_60, %c0_61] : memref<64x32xf32, #tpu.memory_space<vmem>>, vector<64x32xf32>
    %c0_62 = arith.constant 0 : index
    %c0_63 = arith.constant 0 : index
    %216 = vector.load %arg6[%c0_62, %c0_63] : memref<32x128xf32, #tpu.memory_space<vmem>>, vector<32x128xf32>
    %cst_64 = arith.constant dense<0.000000e+00> : vector<64x128xf32>
    %217 = tpu.matmul %215, %216, %cst_64 {dimension_numbers = #tpu.dot_dimension_numbers<[1], [0], [0], [1], [0, 0, 1, 1], [], []>} : vector<64x32xf32>, vector<32x128xf32>, vector<64x128xf32> -> vector<64x128xf32>
    %c0_65 = arith.constant 0 : index
    %c0_66 = arith.constant 0 : index
    %218 = vector.load %arg8[%c0_65, %c0_66] : memref<1x128xf32, #tpu.memory_space<vmem>>, vector<1x128xf32>
    %219 = vector.broadcast %218 : vector<1x128xf32> to vector<64x128xf32>
    %220 = arith.addf %217, %219 : vector<64x128xf32>
    %c0_67 = arith.constant 0 : index
    %c0_68 = arith.constant 0 : index
    %221 = vector.load %arg11[%c0_67, %c0_68] : memref<64x128xf32, #tpu.memory_space<vmem>>, vector<64x128xf32>
    tpu.vector_store %arg11[%c0_67, %c0_68], %220 {strides = array<i32>} : memref<64x128xf32, #tpu.memory_space<vmem>>, vector<64x128xf32>,
    %c0_69 = arith.constant 0 : index
    %c0_70 = arith.constant 0 : index
    %222 = vector.load %arg7[%c0_69, %c0_70] : memref<32x128xf32, #tpu.memory_space<vmem>>, vector<32x128xf32>
    %cst_71 = arith.constant 0.000000e+00 : f32
    %223 = vector.broadcast %cst_71 : f32 to vector<8x32xf32>
    %cst_72 = arith.constant 0.000000e+00 : f32
    %224 = vector.broadcast %cst_72 : f32 to vector<8x32xf32>
    %c0_i32_73 = arith.constant 0 : i32
    %c8_i32_74 = arith.constant 8 : i32
    %225 = arith.muli %c0_i32_73, %c8_i32_74 : i32
    %226 = tpu.assume_multiple %225, 8 : i32
    %227 = arith.index_cast %226 : i32 to index
    %c0_75 = arith.constant 0 : index
    %228 = vector.load %arg11[%227, %c0_75] : memref<64x128xf32, #tpu.memory_space<vmem>>, vector<8x128xf32>
    %cst_76 = arith.constant dense<0.000000e+00> : vector<8x128xf32>
    %229 = tpu.matmul %223, %222, %cst_76 {dimension_numbers = #tpu.dot_dimension_numbers<[1], [0], [0], [1], [0, 0, 1, 1], [], []>} : vector<8x32xf32>, vector<32x128xf32>, vector<8x128xf32> -> vector<8x128xf32>
    %230 = arith.addf %228, %229 : vector<8x128xf32>
    %231 = vector.extract_strided_slice %230 {offsets = [0, 0], sizes = [8, 96], strides = [1, 1]} : vector<8x128xf32> to vector<8x96xf32>
    %232 = arith.negf %231 : vector<8x96xf32>
    %233 = math.exp %232 : vector<8x96xf32>
    %cst_77 = arith.constant 1.000000e+00 : f32
    %234 = vector.broadcast %cst_77 : f32 to vector<8x96xf32>
    %235 = arith.addf %234, %233 : vector<8x96xf32>
    %236 = arith.divf %234, %235 : vector<8x96xf32>
    %237 = vector.extract_strided_slice %230 {offsets = [0, 96], sizes = [8, 32], strides = [1, 1]} : vector<8x128xf32> to vector<8x32xf32>
    %238 = math.tanh %237 : vector<8x32xf32>
    %239 = vector.extract_strided_slice %236 {offsets = [0, 0], sizes = [8, 32], strides = [1, 1]} : vector<8x96xf32> to vector<8x32xf32>
    %240 = vector.extract_strided_slice %236 {offsets = [0, 32], sizes = [8, 32], strides = [1, 1]} : vector<8x96xf32> to vector<8x32xf32>
    %241 = vector.extract_strided_slice %236 {offsets = [0, 64], sizes = [8, 32], strides = [1, 1]} : vector<8x96xf32> to vector<8x32xf32>
    %242 = arith.mulf %240, %224 : vector<8x32xf32>
    %243 = arith.mulf %239, %238 : vector<8x32xf32>
    %244 = arith.addf %242, %243 : vector<8x32xf32>
    %245 = math.tanh %244 : vector<8x32xf32>
    %246 = arith.mulf %241, %245 : vector<8x32xf32>
    %c1_i32_78 = arith.constant 1 : i32
    %c8_i32_79 = arith.constant 8 : i32
    %247 = arith.muli %c1_i32_78, %c8_i32_79 : i32
    %248 = tpu.assume_multiple %247, 8 : i32
    %249 = arith.index_cast %248 : i32 to index
    %c0_80 = arith.constant 0 : index
    %250 = vector.load %arg11[%249, %c0_80] : memref<64x128xf32, #tpu.memory_space<vmem>>, vector<8x128xf32>
    %cst_81 = arith.constant dense<0.000000e+00> : vector<8x128xf32>
    %251 = tpu.matmul %246, %222, %cst_81 {dimension_numbers = #tpu.dot_dimension_numbers<[1], [0], [0], [1], [0, 0, 1, 1], [], []>} : vector<8x32xf32>, vector<32x128xf32>, vector<8x128xf32> -> vector<8x128xf32>
    %252 = arith.addf %250, %251 : vector<8x128xf32>
    %253 = vector.extract_strided_slice %252 {offsets = [0, 0], sizes = [8, 96], strides = [1, 1]} : vector<8x128xf32> to vector<8x96xf32>
    %254 = arith.negf %253 : vector<8x96xf32>
    %255 = math.exp %254 : vector<8x96xf32>
    %cst_82 = arith.constant 1.000000e+00 : f32
    %256 = vector.broadcast %cst_82 : f32 to vector<8x96xf32>
    %257 = arith.addf %256, %255 : vector<8x96xf32>
    %258 = arith.divf %256, %257 : vector<8x96xf32>
    %259 = vector.extract_strided_slice %252 {offsets = [0, 96], sizes = [8, 32], strides = [1, 1]} : vector<8x128xf32> to vector<8x32xf32>
    %260 = math.tanh %259 : vector<8x32xf32>
    %261 = vector.extract_strided_slice %258 {offsets = [0, 0], sizes = [8, 32], strides = [1, 1]} : vector<8x96xf32> to vector<8x32xf32>
    %262 = vector.extract_strided_slice %258 {offsets = [0, 32], sizes = [8, 32], strides = [1, 1]} : vector<8x96xf32> to vector<8x32xf32>
    %263 = vector.extract_strided_slice %258 {offsets = [0, 64], sizes = [8, 32], strides = [1, 1]} : vector<8x96xf32> to vector<8x32xf32>
    %264 = arith.mulf %262, %244 : vector<8x32xf32>
    %265 = arith.mulf %261, %260 : vector<8x32xf32>
    %266 = arith.addf %264, %265 : vector<8x32xf32>
    %267 = math.tanh %266 : vector<8x32xf32>
    %268 = arith.mulf %263, %267 : vector<8x32xf32>
    %c2_i32_83 = arith.constant 2 : i32
    %c8_i32_84 = arith.constant 8 : i32
    %269 = arith.muli %c2_i32_83, %c8_i32_84 : i32
    %270 = tpu.assume_multiple %269, 8 : i32
    %271 = arith.index_cast %270 : i32 to index
    %c0_85 = arith.constant 0 : index
    %272 = vector.load %arg11[%271, %c0_85] : memref<64x128xf32, #tpu.memory_space<vmem>>, vector<8x128xf32>
    %cst_86 = arith.constant dense<0.000000e+00> : vector<8x128xf32>
    %273 = tpu.matmul %268, %222, %cst_86 {dimension_numbers = #tpu.dot_dimension_numbers<[1], [0], [0], [1], [0, 0, 1, 1], [], []>} : vector<8x32xf32>, vector<32x128xf32>, vector<8x128xf32> -> vector<8x128xf32>
    %274 = arith.addf %272, %273 : vector<8x128xf32>
    %275 = vector.extract_strided_slice %274 {offsets = [0, 0], sizes = [8, 96], strides = [1, 1]} : vector<8x128xf32> to vector<8x96xf32>
    %276 = arith.negf %275 : vector<8x96xf32>
    %277 = math.exp %276 : vector<8x96xf32>
    %cst_87 = arith.constant 1.000000e+00 : f32
    %278 = vector.broadcast %cst_87 : f32 to vector<8x96xf32>
    %279 = arith.addf %278, %277 : vector<8x96xf32>
    %280 = arith.divf %278, %279 : vector<8x96xf32>
    %281 = vector.extract_strided_slice %274 {offsets = [0, 96], sizes = [8, 32], strides = [1, 1]} : vector<8x128xf32> to vector<8x32xf32>
    %282 = math.tanh %281 : vector<8x32xf32>
    %283 = vector.extract_strided_slice %280 {offsets = [0, 0], sizes = [8, 32], strides = [1, 1]} : vector<8x96xf32> to vector<8x32xf32>
    %284 = vector.extract_strided_slice %280 {offsets = [0, 32], sizes = [8, 32], strides = [1, 1]} : vector<8x96xf32> to vector<8x32xf32>
    %285 = vector.extract_strided_slice %280 {offsets = [0, 64], sizes = [8, 32], strides = [1, 1]} : vector<8x96xf32> to vector<8x32xf32>
    %286 = arith.mulf %284, %266 : vector<8x32xf32>
    %287 = arith.mulf %283, %282 : vector<8x32xf32>
    %288 = arith.addf %286, %287 : vector<8x32xf32>
    %289 = math.tanh %288 : vector<8x32xf32>
    %290 = arith.mulf %285, %289 : vector<8x32xf32>
    %c3_i32_88 = arith.constant 3 : i32
    %c8_i32_89 = arith.constant 8 : i32
    %291 = arith.muli %c3_i32_88, %c8_i32_89 : i32
    %292 = tpu.assume_multiple %291, 8 : i32
    %293 = arith.index_cast %292 : i32 to index
    %c0_90 = arith.constant 0 : index
    %294 = vector.load %arg11[%293, %c0_90] : memref<64x128xf32, #tpu.memory_space<vmem>>, vector<8x128xf32>
    %cst_91 = arith.constant dense<0.000000e+00> : vector<8x128xf32>
    %295 = tpu.matmul %290, %222, %cst_91 {dimension_numbers = #tpu.dot_dimension_numbers<[1], [0], [0], [1], [0, 0, 1, 1], [], []>} : vector<8x32xf32>, vector<32x128xf32>, vector<8x128xf32> -> vector<8x128xf32>
    %296 = arith.addf %294, %295 : vector<8x128xf32>
    %297 = vector.extract_strided_slice %296 {offsets = [0, 0], sizes = [8, 96], strides = [1, 1]} : vector<8x128xf32> to vector<8x96xf32>
    %298 = arith.negf %297 : vector<8x96xf32>
    %299 = math.exp %298 : vector<8x96xf32>
    %cst_92 = arith.constant 1.000000e+00 : f32
    %300 = vector.broadcast %cst_92 : f32 to vector<8x96xf32>
    %301 = arith.addf %300, %299 : vector<8x96xf32>
    %302 = arith.divf %300, %301 : vector<8x96xf32>
    %303 = vector.extract_strided_slice %296 {offsets = [0, 96], sizes = [8, 32], strides = [1, 1]} : vector<8x128xf32> to vector<8x32xf32>
    %304 = math.tanh %303 : vector<8x32xf32>
    %305 = vector.extract_strided_slice %302 {offsets = [0, 0], sizes = [8, 32], strides = [1, 1]} : vector<8x96xf32> to vector<8x32xf32>
    %306 = vector.extract_strided_slice %302 {offsets = [0, 32], sizes = [8, 32], strides = [1, 1]} : vector<8x96xf32> to vector<8x32xf32>
    %307 = vector.extract_strided_slice %302 {offsets = [0, 64], sizes = [8, 32], strides = [1, 1]} : vector<8x96xf32> to vector<8x32xf32>
    %308 = arith.mulf %306, %288 : vector<8x32xf32>
    %309 = arith.mulf %305, %304 : vector<8x32xf32>
    %310 = arith.addf %308, %309 : vector<8x32xf32>
    %311 = math.tanh %310 : vector<8x32xf32>
    %312 = arith.mulf %307, %311 : vector<8x32xf32>
    %c4_i32_93 = arith.constant 4 : i32
    %c8_i32_94 = arith.constant 8 : i32
    %313 = arith.muli %c4_i32_93, %c8_i32_94 : i32
    %314 = tpu.assume_multiple %313, 8 : i32
    %315 = arith.index_cast %314 : i32 to index
    %c0_95 = arith.constant 0 : index
    %316 = vector.load %arg11[%315, %c0_95] : memref<64x128xf32, #tpu.memory_space<vmem>>, vector<8x128xf32>
    %cst_96 = arith.constant dense<0.000000e+00> : vector<8x128xf32>
    %317 = tpu.matmul %312, %222, %cst_96 {dimension_numbers = #tpu.dot_dimension_numbers<[1], [0], [0], [1], [0, 0, 1, 1], [], []>} : vector<8x32xf32>, vector<32x128xf32>, vector<8x128xf32> -> vector<8x128xf32>
    %318 = arith.addf %316, %317 : vector<8x128xf32>
    %319 = vector.extract_strided_slice %318 {offsets = [0, 0], sizes = [8, 96], strides = [1, 1]} : vector<8x128xf32> to vector<8x96xf32>
    %320 = arith.negf %319 : vector<8x96xf32>
    %321 = math.exp %320 : vector<8x96xf32>
    %cst_97 = arith.constant 1.000000e+00 : f32
    %322 = vector.broadcast %cst_97 : f32 to vector<8x96xf32>
    %323 = arith.addf %322, %321 : vector<8x96xf32>
    %324 = arith.divf %322, %323 : vector<8x96xf32>
    %325 = vector.extract_strided_slice %318 {offsets = [0, 96], sizes = [8, 32], strides = [1, 1]} : vector<8x128xf32> to vector<8x32xf32>
    %326 = math.tanh %325 : vector<8x32xf32>
    %327 = vector.extract_strided_slice %324 {offsets = [0, 0], sizes = [8, 32], strides = [1, 1]} : vector<8x96xf32> to vector<8x32xf32>
    %328 = vector.extract_strided_slice %324 {offsets = [0, 32], sizes = [8, 32], strides = [1, 1]} : vector<8x96xf32> to vector<8x32xf32>
    %329 = vector.extract_strided_slice %324 {offsets = [0, 64], sizes = [8, 32], strides = [1, 1]} : vector<8x96xf32> to vector<8x32xf32>
    %330 = arith.mulf %328, %310 : vector<8x32xf32>
    %331 = arith.mulf %327, %326 : vector<8x32xf32>
    %332 = arith.addf %330, %331 : vector<8x32xf32>
    %333 = math.tanh %332 : vector<8x32xf32>
    %334 = arith.mulf %329, %333 : vector<8x32xf32>
    %c5_i32_98 = arith.constant 5 : i32
    %c8_i32_99 = arith.constant 8 : i32
    %335 = arith.muli %c5_i32_98, %c8_i32_99 : i32
    %336 = tpu.assume_multiple %335, 8 : i32
    %337 = arith.index_cast %336 : i32 to index
    %c0_100 = arith.constant 0 : index
    %338 = vector.load %arg11[%337, %c0_100] : memref<64x128xf32, #tpu.memory_space<vmem>>, vector<8x128xf32>
    %cst_101 = arith.constant dense<0.000000e+00> : vector<8x128xf32>
    %339 = tpu.matmul %334, %222, %cst_101 {dimension_numbers = #tpu.dot_dimension_numbers<[1], [0], [0], [1], [0, 0, 1, 1], [], []>} : vector<8x32xf32>, vector<32x128xf32>, vector<8x128xf32> -> vector<8x128xf32>
    %340 = arith.addf %338, %339 : vector<8x128xf32>
    %341 = vector.extract_strided_slice %340 {offsets = [0, 0], sizes = [8, 96], strides = [1, 1]} : vector<8x128xf32> to vector<8x96xf32>
    %342 = arith.negf %341 : vector<8x96xf32>
    %343 = math.exp %342 : vector<8x96xf32>
    %cst_102 = arith.constant 1.000000e+00 : f32
    %344 = vector.broadcast %cst_102 : f32 to vector<8x96xf32>
    %345 = arith.addf %344, %343 : vector<8x96xf32>
    %346 = arith.divf %344, %345 : vector<8x96xf32>
    %347 = vector.extract_strided_slice %340 {offsets = [0, 96], sizes = [8, 32], strides = [1, 1]} : vector<8x128xf32> to vector<8x32xf32>
    %348 = math.tanh %347 : vector<8x32xf32>
    %349 = vector.extract_strided_slice %346 {offsets = [0, 0], sizes = [8, 32], strides = [1, 1]} : vector<8x96xf32> to vector<8x32xf32>
    %350 = vector.extract_strided_slice %346 {offsets = [0, 32], sizes = [8, 32], strides = [1, 1]} : vector<8x96xf32> to vector<8x32xf32>
    %351 = vector.extract_strided_slice %346 {offsets = [0, 64], sizes = [8, 32], strides = [1, 1]} : vector<8x96xf32> to vector<8x32xf32>
    %352 = arith.mulf %350, %332 : vector<8x32xf32>
    %353 = arith.mulf %349, %348 : vector<8x32xf32>
    %354 = arith.addf %352, %353 : vector<8x32xf32>
    %355 = math.tanh %354 : vector<8x32xf32>
    %356 = arith.mulf %351, %355 : vector<8x32xf32>
    %c6_i32_103 = arith.constant 6 : i32
    %c8_i32_104 = arith.constant 8 : i32
    %357 = arith.muli %c6_i32_103, %c8_i32_104 : i32
    %358 = tpu.assume_multiple %357, 8 : i32
    %359 = arith.index_cast %358 : i32 to index
    %c0_105 = arith.constant 0 : index
    %360 = vector.load %arg11[%359, %c0_105] : memref<64x128xf32, #tpu.memory_space<vmem>>, vector<8x128xf32>
    %cst_106 = arith.constant dense<0.000000e+00> : vector<8x128xf32>
    %361 = tpu.matmul %356, %222, %cst_106 {dimension_numbers = #tpu.dot_dimension_numbers<[1], [0], [0], [1], [0, 0, 1, 1], [], []>} : vector<8x32xf32>, vector<32x128xf32>, vector<8x128xf32> -> vector<8x128xf32>
    %362 = arith.addf %360, %361 : vector<8x128xf32>
    %363 = vector.extract_strided_slice %362 {offsets = [0, 0], sizes = [8, 96], strides = [1, 1]} : vector<8x128xf32> to vector<8x96xf32>
    %364 = arith.negf %363 : vector<8x96xf32>
    %365 = math.exp %364 : vector<8x96xf32>
    %cst_107 = arith.constant 1.000000e+00 : f32
    %366 = vector.broadcast %cst_107 : f32 to vector<8x96xf32>
    %367 = arith.addf %366, %365 : vector<8x96xf32>
    %368 = arith.divf %366, %367 : vector<8x96xf32>
    %369 = vector.extract_strided_slice %362 {offsets = [0, 96], sizes = [8, 32], strides = [1, 1]} : vector<8x128xf32> to vector<8x32xf32>
    %370 = math.tanh %369 : vector<8x32xf32>
    %371 = vector.extract_strided_slice %368 {offsets = [0, 0], sizes = [8, 32], strides = [1, 1]} : vector<8x96xf32> to vector<8x32xf32>
    %372 = vector.extract_strided_slice %368 {offsets = [0, 32], sizes = [8, 32], strides = [1, 1]} : vector<8x96xf32> to vector<8x32xf32>
    %373 = vector.extract_strided_slice %368 {offsets = [0, 64], sizes = [8, 32], strides = [1, 1]} : vector<8x96xf32> to vector<8x32xf32>
    %374 = arith.mulf %372, %354 : vector<8x32xf32>
    %375 = arith.mulf %371, %370 : vector<8x32xf32>
    %376 = arith.addf %374, %375 : vector<8x32xf32>
    %377 = math.tanh %376 : vector<8x32xf32>
    %378 = arith.mulf %373, %377 : vector<8x32xf32>
    %c7_i32_108 = arith.constant 7 : i32
    %c8_i32_109 = arith.constant 8 : i32
    %379 = arith.muli %c7_i32_108, %c8_i32_109 : i32
    %380 = tpu.assume_multiple %379, 8 : i32
    %381 = arith.index_cast %380 : i32 to index
    %c0_110 = arith.constant 0 : index
    %382 = vector.load %arg11[%381, %c0_110] : memref<64x128xf32, #tpu.memory_space<vmem>>, vector<8x128xf32>
    %cst_111 = arith.constant dense<0.000000e+00> : vector<8x128xf32>
    %383 = tpu.matmul %378, %222, %cst_111 {dimension_numbers = #tpu.dot_dimension_numbers<[1], [0], [0], [1], [0, 0, 1, 1], [], []>} : vector<8x32xf32>, vector<32x128xf32>, vector<8x128xf32> -> vector<8x128xf32>
    %384 = arith.addf %382, %383 : vector<8x128xf32>
    %385 = vector.extract_strided_slice %384 {offsets = [0, 0], sizes = [8, 96], strides = [1, 1]} : vector<8x128xf32> to vector<8x96xf32>
    %386 = arith.negf %385 : vector<8x96xf32>
    %387 = math.exp %386 : vector<8x96xf32>
    %cst_112 = arith.constant 1.000000e+00 : f32
    %388 = vector.broadcast %cst_112 : f32 to vector<8x96xf32>
    %389 = arith.addf %388, %387 : vector<8x96xf32>
    %390 = arith.divf %388, %389 : vector<8x96xf32>
    %391 = vector.extract_strided_slice %384 {offsets = [0, 96], sizes = [8, 32], strides = [1, 1]} : vector<8x128xf32> to vector<8x32xf32>
    %392 = math.tanh %391 : vector<8x32xf32>
    %393 = vector.extract_strided_slice %390 {offsets = [0, 0], sizes = [8, 32], strides = [1, 1]} : vector<8x96xf32> to vector<8x32xf32>
    %394 = vector.extract_strided_slice %390 {offsets = [0, 32], sizes = [8, 32], strides = [1, 1]} : vector<8x96xf32> to vector<8x32xf32>
    %395 = vector.extract_strided_slice %390 {offsets = [0, 64], sizes = [8, 32], strides = [1, 1]} : vector<8x96xf32> to vector<8x32xf32>
    %396 = arith.mulf %394, %376 : vector<8x32xf32>
    %397 = arith.mulf %393, %392 : vector<8x32xf32>
    %398 = arith.addf %396, %397 : vector<8x32xf32>
    %399 = math.tanh %398 : vector<8x32xf32>
    %400 = arith.mulf %395, %399 : vector<8x32xf32>
    %c8_i32_113 = arith.constant 8 : i32
    %c1 = arith.constant 1 : index
    %c0_114 = arith.constant 0 : index
    %c0_115 = arith.constant 0 : index
    %401 = vector.load %arg9[%c1, %c0_114, %c0_115] : memref<2x8x32xf32, #tpu.memory_space<vmem>>, vector<1x8x32xf32>
    %402 = vector.shape_cast %401 : vector<1x8x32xf32> to vector<8x32xf32>
    %403 = vector.shape_cast %400 : vector<8x32xf32> to vector<1x8x32xf32>
    tpu.vector_store %arg9[%c1, %c0_114, %c0_115], %403 {strides = array<i32>} : memref<2x8x32xf32, #tpu.memory_space<vmem>>, vector<1x8x32xf32>,
    %c1_116 = arith.constant 1 : index
    %c0_117 = arith.constant 0 : index
    %c0_118 = arith.constant 0 : index
    %404 = vector.load %arg10[%c1_116, %c0_117, %c0_118] : memref<2x8x32xf32, #tpu.memory_space<vmem>>, vector<1x8x32xf32>
    %405 = vector.shape_cast %404 : vector<1x8x32xf32> to vector<8x32xf32>
    %406 = vector.shape_cast %398 : vector<8x32xf32> to vector<1x8x32xf32>
    tpu.vector_store %arg10[%c1_116, %c0_117, %c0_118], %406 {strides = array<i32>} : memref<2x8x32xf32, #tpu.memory_space<vmem>>, vector<1x8x32xf32>,
    return
  }
  func.func @transform_0(%arg0: i32) -> (i32, i32) {
    %c0_i32 = arith.constant 0 : i32
    %c0_i32_0 = arith.constant 0 : i32
    %c0_i32_1 = arith.constant 0 : i32
    return %c0_i32, %c0_i32_0 : i32, i32
  }
  func.func @transform_1(%arg0: i32) -> (i32, i32) {
    %c0_i32 = arith.constant 0 : i32
    %c0_i32_0 = arith.constant 0 : i32
    %c0_i32_1 = arith.constant 0 : i32
    return %c0_i32, %c0_i32_0 : i32, i32
  }
  func.func @transform_2(%arg0: i32) -> (i32, i32) {
    %c0_i32 = arith.constant 0 : i32
    %c0_i32_0 = arith.constant 0 : i32
    %c0_i32_1 = arith.constant 0 : i32
    return %c0_i32, %c0_i32_0 : i32, i32
  }
  func.func @transform_3(%arg0: i32) -> (i32, i32) {
    %c0_i32 = arith.constant 0 : i32
    %c0_i32_0 = arith.constant 0 : i32
    %c0_i32_1 = arith.constant 0 : i32
    return %c0_i32, %c0_i32_0 : i32, i32
  }
  func.func @transform_4(%arg0: i32) -> (i32, i32) {
    %c0_i32 = arith.constant 0 : i32
    %c0_i32_0 = arith.constant 0 : i32
    %c0_i32_1 = arith.constant 0 : i32
    return %c0_i32, %c0_i32_0 : i32, i32
  }
  func.func @transform_5(%arg0: i32) -> (i32, i32) {
    %c0_i32 = arith.constant 0 : i32
    %c0_i32_0 = arith.constant 0 : i32
    %c0_i32_1 = arith.constant 0 : i32
    return %c0_i32, %c0_i32_0 : i32, i32
  }
  func.func @transform_6(%arg0: i32) -> (i32, i32) {
    %c0_i32 = arith.constant 0 : i32
    %c0_i32_0 = arith.constant 0 : i32
    %c0_i32_1 = arith.constant 0 : i32
    return %c0_i32, %c0_i32_0 : i32, i32
  }
  func.func @transform_7(%arg0: i32) -> (i32, i32) {
    %c0_i32 = arith.constant 0 : i32
    %c0_i32_0 = arith.constant 0 : i32
    %c0_i32_1 = arith.constant 0 : i32
    return %c0_i32, %c0_i32_0 : i32, i32
  }
  func.func @transform_8(%arg0: i32) -> (i32, i32, i32) {
    %c0_i32 = arith.constant 0 : i32
    %c0_i32_0 = arith.constant 0 : i32
    %c0_i32_1 = arith.constant 0 : i32
    %c0_i32_2 = arith.constant 0 : i32
    return %c0_i32, %c0_i32_0, %c0_i32_1 : i32, i32, i32
  }
  func.func @transform_9(%arg0: i32) -> (i32, i32, i32) {
    %c0_i32 = arith.constant 0 : i32
    %c0_i32_0 = arith.constant 0 : i32
    %c0_i32_1 = arith.constant 0 : i32
    %c0_i32_2 = arith.constant 0 : i32
    return %c0_i32, %c0_i32_0, %c0_i32_1 : i32, i32, i32
  }
}

</mosaic_0001>

<llo_original>
// kernel: encoder_forward.1
$region0: #{encoder_forward.1}
  #allocation0 [shape = 'u32[]', space=smem, size = 0x4, offset = 0x4, fixed_abs, tag = 'smem constant byte address 0x4 - core index']
  #allocation1 [shape = 'u32[144,128]{1,0:T(1,128)}', space=vmem, size = 0x12000, scoped, tag = 'internal scratch']
  #allocation2 [shape = 'f32[64,128]{1,0:T(8,128)}', space=vmem, size = 0x8000, scoped, tag = 'scratch operand']
  #allocation3 [shape = 'f32[64,32]{1,0:T(8,128)}', space=vmem, size = 0x8000, scoped, tag = 'scratch operand']
  %s0 = inlined_call_operand.vmem [shape: s32[64,1], index: 0, kind: input, shape index: {}]
  %s1 = inlined_call_operand.vmem [shape: f32[128,32], index: 1, kind: input, shape index: {}]
  %s2 = inlined_call_operand.vmem [shape: f32[32,128], index: 2, kind: input, shape index: {}]
  %s3 = inlined_call_operand.vmem [shape: f32[32,128], index: 3, kind: input, shape index: {}]
  %s4 = inlined_call_operand.vmem [shape: f32[1,128], index: 4, kind: input, shape index: {}]
  %s5 = inlined_call_operand.vmem [shape: f32[32,128], index: 5, kind: input, shape index: {}]
  %s6 = inlined_call_operand.vmem [shape: f32[32,128], index: 6, kind: input, shape index: {}]
  %s7 = inlined_call_operand.vmem [shape: f32[1,128], index: 7, kind: input, shape index: {}]
  %s8 = inlined_call_operand.vmem [shape: f32[2,8,32], index: 8, kind: output, shape index: {0}]
  %s9 = inlined_call_operand.vmem [shape: f32[2,8,32], index: 9, kind: output, shape index: {1}]
  %10 = xla_tuple %s8, %s9
  %s11 = sld [smem:[#allocation0]]
  $region50: #{encoder_forward.1} parent=0
    _
  %s13 = ssub.s32 1, %s11
  %s14 = scalar_select 0, %s13, %s11
  // Predicated region
  $region2: #{encoder_forward.1} parent=0 // pred_check
    _
  $region3: #{encoder_forward.1} parent=0 // pred_check_branch
    %16 = sbr.rel (0) target = $region5
  $region4: #{encoder_forward.1} parent=0 // pred_region
    _
  $region5: #{encoder_forward.1} parent=0 // pred_fallthru
    _
  // Predicated region
  $region6: #{encoder_forward.1} parent=0 // pred_check
    _
  $region7: #{encoder_forward.1} parent=0 // pred_check_branch
    %18 = sbr.rel (0) target = $region9
  $region8: #{encoder_forward.1} parent=0 // pred_region
    _
  $region9: #{encoder_forward.1} parent=0 // pred_fallthru
    _
  // Predicated region
  $region10: #{encoder_forward.1} parent=0 // pred_check
    _
  $region11: #{encoder_forward.1} parent=0 // pred_check_branch
    %20 = sbr.rel (0) target = $region13
  $region12: #{encoder_forward.1} parent=0 // pred_region
    _
  $region13: #{encoder_forward.1} parent=0 // pred_fallthru
    _
  // Predicated region
  $region14: #{encoder_forward.1} parent=0 // pred_check
    _
  $region15: #{encoder_forward.1} parent=0 // pred_check_branch
    %22 = sbr.rel (0) target = $region17
  $region16: #{encoder_forward.1} parent=0 // pred_region
    _
  $region17: #{encoder_forward.1} parent=0 // pred_fallthru
    _
  // Predicated region
  $region18: #{encoder_forward.1} parent=0 // pred_check
    _
  $region19: #{encoder_forward.1} parent=0 // pred_check_branch
    %24 = sbr.rel (0) target = $region21
  $region20: #{encoder_forward.1} parent=0 // pred_region
    _
  $region21: #{encoder_forward.1} parent=0 // pred_fallthru
    _
  // Predicated region
  $region22: #{encoder_forward.1} parent=0 // pred_check
    _
  $region23: #{encoder_forward.1} parent=0 // pred_check_branch
    %26 = sbr.rel (0) target = $region25
  $region24: #{encoder_forward.1} parent=0 // pred_region
    _
  $region25: #{encoder_forward.1} parent=0 // pred_fallthru
    _
  // Predicated region
  $region26: #{encoder_forward.1} parent=0 // pred_check
    _
  $region27: #{encoder_forward.1} parent=0 // pred_check_branch
    %28 = sbr.rel (0) target = $region29
  $region28: #{encoder_forward.1} parent=0 // pred_region
    _
  $region29: #{encoder_forward.1} parent=0 // pred_fallthru
    _
  // Predicated region
  $region30: #{encoder_forward.1} parent=0 // pred_check
    _
  $region31: #{encoder_forward.1} parent=0 // pred_check_branch
    %30 = sbr.rel (0) target = $region33
  $region32: #{encoder_forward.1} parent=0 // pred_region
    _
  $region33: #{encoder_forward.1} parent=0 // pred_fallthru
    _
  %v31 = vlaneseq
  %v32 = vand.u32 %v31, 127
  %v33 = vld [vmem:[%s0] sm:$0xff]
  %v34 = vld [vmem:[%s0 + $0x8] sm:$0xff]
  %v35 = vld [vmem:[%s0 + $0x10] sm:$0xff]
  %v36 = vld [vmem:[%s0 + $0x18] sm:$0xff]
  %v37 = vld [vmem:[%s0 + $0x20] sm:$0xff]
  %v38 = vld [vmem:[%s0 + $0x28] sm:$0xff]
  %v39 = vld [vmem:[%s0 + $0x30] sm:$0xff]
  %v40 = vld [vmem:[%s0 + $0x38] sm:$0xff]
  %41 = vset.pattern.permute.xlu0 0
  %42 = vperm.xlu0 %41, %v33
  %v43 = vpop.permute.xlu0 %42
  %44 = vset.pattern.permute.xlu0 0
  %45 = vperm.xlu0 %44, %v34
  %v46 = vpop.permute.xlu0 %45
  %47 = vset.pattern.permute.xlu0 0
  %48 = vperm.xlu0 %47, %v35
  %v49 = vpop.permute.xlu0 %48
  %50 = vset.pattern.permute.xlu0 0
  %51 = vperm.xlu0 %50, %v36
  %v52 = vpop.permute.xlu0 %51
  %53 = vset.pattern.permute.xlu0 0
  %54 = vperm.xlu0 %53, %v37
  %v55 = vpop.permute.xlu0 %54
  %56 = vset.pattern.permute.xlu0 0
  %57 = vperm.xlu0 %56, %v38
  %v58 = vpop.permute.xlu0 %57
  %59 = vset.pattern.permute.xlu0 0
  %60 = vperm.xlu0 %59, %v39
  %v61 = vpop.permute.xlu0 %60
  %62 = vset.pattern.permute.xlu0 0
  %63 = vperm.xlu0 %62, %v40
  %v64 = vpop.permute.xlu0 %63
  %vm65 = vcmp.eq.s32.totalorder %v32, %v43
  %vm66 = vcmp.eq.s32.totalorder %v32, %v46
  %vm67 = vcmp.eq.s32.totalorder %v32, %v49
  %vm68 = vcmp.eq.s32.totalorder %v32, %v52
  %vm69 = vcmp.eq.s32.totalorder %v32, %v55
  %vm70 = vcmp.eq.s32.totalorder %v32, %v58
  %vm71 = vcmp.eq.s32.totalorder %v32, %v61
  %vm72 = vcmp.eq.s32.totalorder %v32, %v64
  %v73 = vsel %vm65, 1, 0
  %v74 = vsel %vm66, 1, 0
  %v75 = vsel %vm67, 1, 0
  %v76 = vsel %vm68, 1, 0
  %v77 = vsel %vm69, 1, 0
  %v78 = vsel %vm70, 1, 0
  %v79 = vsel %vm71, 1, 0
  %v80 = vsel %vm72, 1, 0
  %v81 = vcvt.s32.f32 %v73
  %v82 = vcvt.s32.f32 %v74
  %v83 = vcvt.s32.f32 %v75
  %v84 = vcvt.s32.f32 %v76
  %v85 = vcvt.s32.f32 %v77
  %v86 = vcvt.s32.f32 %v78
  %v87 = vcvt.s32.f32 %v79
  %v88 = vcvt.s32.f32 %v80
  %v89 = vld [vmem:[%s1] sm:$0xff]
  %v90 = vld [vmem:[%s1 + $0x8] sm:$0xff]
  %v91 = vld [vmem:[%s1 + $0x10] sm:$0xff]
  %v92 = vld [vmem:[%s1 + $0x18] sm:$0xff]
  %v93 = vld [vmem:[%s1 + $0x20] sm:$0xff]
  %v94 = vld [vmem:[%s1 + $0x28] sm:$0xff]
  %v95 = vld [vmem:[%s1 + $0x30] sm:$0xff]
  %v96 = vld [vmem:[%s1 + $0x38] sm:$0xff]
  %v97 = vld [vmem:[%s1 + $0x40] sm:$0xff]
  %v98 = vld [vmem:[%s1 + $0x48] sm:$0xff]
  %v99 = vld [vmem:[%s1 + $0x50] sm:$0xff]
  %v100 = vld [vmem:[%s1 + $0x58] sm:$0xff]
  %v101 = vld [vmem:[%s1 + $0x60] sm:$0xff]
  %v102 = vld [vmem:[%s1 + $0x68] sm:$0xff]
  %v103 = vld [vmem:[%s1 + $0x70] sm:$0xff]
  %v104 = vld [vmem:[%s1 + $0x78] sm:$0xff]
  %105 = vmatprep.subr.mxu0 0.0
  %106 = vmatpush1.msra.mxu0 %v89
  %107 = vmatprep.subr.mxu0 0.0
  %108 = vmatpush1.msra.mxu0 %v90
  %109 = vmatprep.subr.mxu0 0.0
  %110 = vmatpush1.msra.mxu0 %v91
  %111 = vmatprep.subr.mxu0 0.0
  %112 = vmatpush1.msra.mxu0 %v92
  %113 = vmatprep.subr.mxu0 0.0
  %114 = vmatpush1.msra.mxu0 %v93
  %115 = vmatprep.subr.mxu0 0.0
  %116 = vmatpush1.msra.mxu0 %v94
  %117 = vmatprep.subr.mxu0 0.0
  %118 = vmatpush1.msra.mxu0 %v95
  %119 = vmatprep.subr.mxu0 0.0
  %120 = vmatpush1.msra.mxu0 %v96
  %121 = vmatprep.subr.mxu0 0.0
  %122 = vmatpush1.msra.mxu0 %v97
  %123 = vmatprep.subr.mxu0 0.0
  %124 = vmatpush1.msra.mxu0 %v98
  %125 = vmatprep.subr.mxu0 0.0
  %126 = vmatpush1.msra.mxu0 %v99
  %127 = vmatprep.subr.mxu0 0.0
  %128 = vmatpush1.msra.mxu0 %v100
  %129 = vmatprep.subr.mxu0 0.0
  %130 = vmatpush1.msra.mxu0 %v101
  %131 = vmatprep.subr.mxu0 0.0
  %132 = vmatpush1.msra.mxu0 %v102
  %133 = vmatprep.subr.mxu0 0.0
  %134 = vmatpush1.msra.mxu0 %v103
  %135 = vmatprep.subr.mxu0 0.0
  %136 = vmatpush1.msra.mxu0 %v104
  %137 = vmatprep.subr.mxu0 0.0
  %138 = vmatpush1.msra.mxu0 0.0
  %139 = vmatprep.subr.mxu0 0.0
  %140 = vmatpush1.msra.mxu0 0.0
  %141 = vmatprep.subr.mxu0 0.0
  %142 = vmatpush1.msra.mxu0 0.0
  %143 = vmatprep.subr.mxu0 0.0
  %144 = vmatpush1.msra.mxu0 0.0
  %145 = vmatprep.subr.mxu0 0.0
  %146 = vmatpush1.msra.mxu0 0.0
  %147 = vmatprep.subr.mxu0 0.0
  %148 = vmatpush1.msra.mxu0 0.0
  %149 = vmatprep.subr.mxu0 0.0
  %150 = vmatpush1.msra.mxu0 0.0
  %151 = vmatprep.subr.mxu0 0.0
  %152 = vmatpush1.msra.mxu0 0.0
  %153 = vmatprep.subr.mxu0 0.0
  %154 = vmatpush1.msra.mxu0 0.0
  %155 = vmatprep.subr.mxu0 0.0
  %156 = vmatpush1.msra.mxu0 0.0
  %157 = vmatprep.subr.mxu0 0.0
  %158 = vmatpush1.msra.mxu0 0.0
  %159 = vmatprep.subr.mxu0 0.0
  %160 = vmatpush1.msra.mxu0 0.0
  %161 = vmatprep.subr.mxu0 0.0
  %162 = vmatpush1.msra.mxu0 0.0
  %163 = vmatprep.subr.mxu0 0.0
  %164 = vmatpush1.msra.mxu0 0.0
  %165 = vmatprep.subr.mxu0 0.0
  %166 = vmatpush1.msra.mxu0 0.0
  %167 = vmatprep.subr.mxu0 0.0
  %168 = vmatpush1.msra.mxu0 0.0
  %169 = vmatprep.mubr.f32.mxu0 0.0
  %170 = vmatmul.mubr.f32.gmra.mrb[0].mxu0 %v81
  %v171 = vpop.f32.mrb[0].mxu0
  %v172 = vadd.f32 0.0, %v171
  %v173 = vpop.f32.mrb[0].mxu0
  %174 = vmatprep.mubr.f32.mxu0 0.0
  %175 = vmatmul.mubr.f32.gmra.mrb[0].mxu0 %v82
  %v176 = vpop.f32.mrb[0].mxu0
  %v177 = vadd.f32 0.0, %v176
  %v178 = vpop.f32.mrb[0].mxu0
  %179 = vmatprep.mubr.f32.mxu0 0.0
  %180 = vmatmul.mubr.f32.gmra.mrb[0].mxu0 %v83
  %v181 = vpop.f32.mrb[0].mxu0
  %v182 = vadd.f32 0.0, %v181
  %v183 = vpop.f32.mrb[0].mxu0
  %184 = vmatprep.mubr.f32.mxu0 0.0
  %185 = vmatmul.mubr.f32.gmra.mrb[0].mxu0 %v84
  %v186 = vpop.f32.mrb[0].mxu0
  %v187 = vadd.f32 0.0, %v186
  %v188 = vpop.f32.mrb[0].mxu0
  %189 = vmatprep.mubr.f32.mxu0 0.0
  %190 = vmatmul.mubr.f32.gmra.mrb[0].mxu0 %v85
  %v191 = vpop.f32.mrb[0].mxu0
  %v192 = vadd.f32 0.0, %v191
  %v193 = vpop.f32.mrb[0].mxu0
  %194 = vmatprep.mubr.f32.mxu0 0.0
  %195 = vmatmul.mubr.f32.gmra.mrb[0].mxu0 %v86
  %v196 = vpop.f32.mrb[0].mxu0
  %v197 = vadd.f32 0.0, %v196
  %v198 = vpop.f32.mrb[0].mxu0
  %199 = vmatprep.mubr.f32.mxu0 0.0
  %200 = vmatmul.mubr.f32.gmra.mrb[0].mxu0 %v87
  %v201 = vpop.f32.mrb[0].mxu0
  %v202 = vadd.f32 0.0, %v201
  %v203 = vpop.f32.mrb[0].mxu0
  %204 = vmatprep.mubr.f32.mxu0 0.0
  %205 = vmatmul.mubr.f32.gmra.mrb[0].mxu0 %v88
  %v206 = vpop.f32.mrb[0].mxu0
  %v207 = vadd.f32 0.0, %v206
  %v208 = vpop.f32.mrb[0].mxu0
  %209 = vdwg.mxu0
  %v210 = vld [vmem:[%s2] sm:$0xff]
  %v211 = vld [vmem:[%s2 + $0x8] sm:$0xff]
  %v212 = vld [vmem:[%s2 + $0x10] sm:$0xff]
  %v213 = vld [vmem:[%s2 + $0x18] sm:$0xff]
  %v214 = vld [vmem:[%s4] sm:$0x1]
  %v216 = vlaneseq
  %v217 = vshrl.u32 %v216, 7
  %v218 = vsub.s32 0, %v217
  %v219 = vrot.slane %v214, %v218
  %vm221 = vcmask 261120
  %v223 = vsel %vm221, %v172, 0
  %v226 = vsel %vm221, %v177, 0
  %v229 = vsel %vm221, %v182, 0
  %v232 = vsel %vm221, %v187, 0
  %v235 = vsel %vm221, %v192, 0
  %v238 = vsel %vm221, %v197, 0
  %v241 = vsel %vm221, %v202, 0
  %v244 = vsel %vm221, %v207, 0
  %246 = vmatprep.subr.mxu0 0.0
  %247 = vmatpush1.msra.mxu0 %v210
  %248 = vmatprep.subr.mxu0 0.0
  %249 = vmatpush1.msra.mxu0 %v211
  %250 = vmatprep.subr.mxu0 0.0
  %251 = vmatpush1.msra.mxu0 %v212
  %252 = vmatprep.subr.mxu0 0.0
  %253 = vmatpush1.msra.mxu0 %v213
  %254 = vmatprep.subr.mxu0 0.0
  %255 = vmatpush1.msra.mxu0 0.0
  %256 = vmatprep.subr.mxu0 0.0
  %257 = vmatpush1.msra.mxu0 0.0
  %258 = vmatprep.subr.mxu0 0.0
  %259 = vmatpush1.msra.mxu0 0.0
  %260 = vmatprep.subr.mxu0 0.0
  %261 = vmatpush1.msra.mxu0 0.0
  %262 = vmatprep.subr.mxu0 0.0
  %263 = vmatpush1.msra.mxu0 0.0
  %264 = vmatprep.subr.mxu0 0.0
  %265 = vmatpush1.msra.mxu0 0.0
  %266 = vmatprep.subr.mxu0 0.0
  %267 = vmatpush1.msra.mxu0 0.0
  %268 = vmatprep.subr.mxu0 0.0
  %269 = vmatpush1.msra.mxu0 0.0
  %270 = vmatprep.subr.mxu0 0.0
  %271 = vmatpush1.msra.mxu0 0.0
  %272 = vmatprep.subr.mxu0 0.0
  %273 = vmatpush1.msra.mxu0 0.0
  %274 = vmatprep.subr.mxu0 0.0
  %275 = vmatpush1.msra.mxu0 0.0
  %276 = vmatprep.subr.mxu0 0.0
  %277 = vmatpush1.msra.mxu0 0.0
  %278 = vmatprep.subr.mxu0 0.0
  %279 = vmatpush1.msra.mxu0 0.0
  %280 = vmatprep.subr.mxu0 0.0
  %281 = vmatpush1.msra.mxu0 0.0
  %282 = vmatprep.subr.mxu0 0.0
  %283 = vmatpush1.msra.mxu0 0.0
  %284 = vmatprep.subr.mxu0 0.0
  %285 = vmatpush1.msra.mxu0 0.0
  %286 = vmatprep.subr.mxu0 0.0
  %287 = vmatpush1.msra.mxu0 0.0
  %288 = vmatprep.subr.mxu0 0.0
  %289 = vmatpush1.msra.mxu0 0.0
  %290 = vmatprep.subr.mxu0 0.0
  %291 = vmatpush1.msra.mxu0 0.0
  %292 = vmatprep.subr.mxu0 0.0
  %293 = vmatpush1.msra.mxu0 0.0
  %294 = vmatprep.subr.mxu0 0.0
  %295 = vmatpush1.msra.mxu0 0.0
  %296 = vmatprep.subr.mxu0 0.0
  %297 = vmatpush1.msra.mxu0 0.0
  %298 = vmatprep.subr.mxu0 0.0
  %299 = vmatpush1.msra.mxu0 0.0
  %300 = vmatprep.subr.mxu0 0.0
  %301 = vmatpush1.msra.mxu0 0.0
  %302 = vmatprep.subr.mxu0 0.0
  %303 = vmatpush1.msra.mxu0 0.0
  %304 = vmatprep.subr.mxu0 0.0
  %305 = vmatpush1.msra.mxu0 0.0
  %306 = vmatprep.subr.mxu0 0.0
  %307 = vmatpush1.msra.mxu0 0.0
  %308 = vmatprep.subr.mxu0 0.0
  %309 = vmatpush1.msra.mxu0 0.0
  %310 = vmatprep.mubr.f32.mxu0 0.0
  %311 = vmatmul.mubr.f32.gmra.mrb[0].mxu0 %v223
  %v312 = vpop.f32.mrb[0].mxu0
  %v313 = vadd.f32 %v219, %v312
  %v314 = vpop.f32.mrb[0].mxu0
  %315 = vmatprep.mubr.f32.mxu0 0.0
  %316 = vmatmul.mubr.f32.gmra.mrb[0].mxu0 %v226
  %v317 = vpop.f32.mrb[0].mxu0
  %v318 = vadd.f32 %v219, %v317
  %v319 = vpop.f32.mrb[0].mxu0
  %320 = vmatprep.mubr.f32.mxu0 0.0
  %321 = vmatmul.mubr.f32.gmra.mrb[0].mxu0 %v229
  %v322 = vpop.f32.mrb[0].mxu0
  %v323 = vadd.f32 %v219, %v322
  %v324 = vpop.f32.mrb[0].mxu0
  %325 = vmatprep.mubr.f32.mxu0 0.0
  %326 = vmatmul.mubr.f32.gmra.mrb[0].mxu0 %v232
  %v327 = vpop.f32.mrb[0].mxu0
  %v328 = vadd.f32 %v219, %v327
  %v329 = vpop.f32.mrb[0].mxu0
  %330 = vmatprep.mubr.f32.mxu0 0.0
  %331 = vmatmul.mubr.f32.gmra.mrb[0].mxu0 %v235
  %v332 = vpop.f32.mrb[0].mxu0
  %v333 = vadd.f32 %v219, %v332
  %v334 = vpop.f32.mrb[0].mxu0
  %335 = vmatprep.mubr.f32.mxu0 0.0
  %336 = vmatmul.mubr.f32.gmra.mrb[0].mxu0 %v238
  %v337 = vpop.f32.mrb[0].mxu0
  %v338 = vadd.f32 %v219, %v337
  %v339 = vpop.f32.mrb[0].mxu0
  %340 = vmatprep.mubr.f32.mxu0 0.0
  %341 = vmatmul.mubr.f32.gmra.mrb[0].mxu0 %v241
  %v342 = vpop.f32.mrb[0].mxu0
  %v343 = vadd.f32 %v219, %v342
  %v344 = vpop.f32.mrb[0].mxu0
  %345 = vmatprep.mubr.f32.mxu0 0.0
  %346 = vmatmul.mubr.f32.gmra.mrb[0].mxu0 %v244
  %v347 = vpop.f32.mrb[0].mxu0
  %v348 = vadd.f32 %v219, %v347
  %v349 = vpop.f32.mrb[0].mxu0
  %350 = vdwg.mxu0
  %351 = vst [vmem:[#allocation2] sm:$0xff] %v313
  %352 = vst [vmem:[#allocation2 + $0x8] sm:$0xff] %v318
  %353 = vst [vmem:[#allocation2 + $0x10] sm:$0xff] %v323
  %354 = vst [vmem:[#allocation2 + $0x18] sm:$0xff] %v328
  %355 = vst [vmem:[#allocation2 + $0x20] sm:$0xff] %v333
  %356 = vst [vmem:[#allocation2 + $0x28] sm:$0xff] %v338
  %357 = vst [vmem:[#allocation2 + $0x30] sm:$0xff] %v343
  %358 = vst [vmem:[#allocation2 + $0x38] sm:$0xff] %v348
  %v359 = vld [vmem:[%s3] sm:$0xff]
  %v360 = vld [vmem:[%s3 + $0x8] sm:$0xff]
  %v361 = vld [vmem:[%s3 + $0x10] sm:$0xff]
  %v362 = vld [vmem:[%s3 + $0x18] sm:$0xff]
  %v363 = vld [vmem:[#allocation2] sm:$0xff]
  %v365 = vsel %vm221, 0.0, 0
  %367 = vmatprep.subr.mxu0 0.0
  %368 = vmatpush1.msra.mxu0 %v359
  %369 = vmatprep.subr.mxu0 0.0
  %370 = vmatpush1.msra.mxu0 %v360
  %371 = vmatprep.subr.mxu0 0.0
  %372 = vmatpush1.msra.mxu0 %v361
  %373 = vmatprep.subr.mxu0 0.0
  %374 = vmatpush1.msra.mxu0 %v362
  %375 = vmatprep.subr.mxu0 0.0
  %376 = vmatpush1.msra.mxu0 0.0
  %377 = vmatprep.subr.mxu0 0.0
  %378 = vmatpush1.msra.mxu0 0.0
  %379 = vmatprep.subr.mxu0 0.0
  %380 = vmatpush1.msra.mxu0 0.0
  %381 = vmatprep.subr.mxu0 0.0
  %382 = vmatpush1.msra.mxu0 0.0
  %383 = vmatprep.subr.mxu0 0.0
  %384 = vmatpush1.msra.mxu0 0.0
  %385 = vmatprep.subr.mxu0 0.0
  %386 = vmatpush1.msra.mxu0 0.0
  %387 = vmatprep.subr.mxu0 0.0
  %388 = vmatpush1.msra.mxu0 0.0
  %389 = vmatprep.subr.mxu0 0.0
  %390 = vmatpush1.msra.mxu0 0.0
  %391 = vmatprep.subr.mxu0 0.0
  %392 = vmatpush1.msra.mxu0 0.0
  %393 = vmatprep.subr.mxu0 0.0
  %394 = vmatpush1.msra.mxu0 0.0
  %395 = vmatprep.subr.mxu0 0.0
  %396 = vmatpush1.msra.mxu0 0.0
  %397 = vmatprep.subr.mxu0 0.0
  %398 = vmatpush1.msra.mxu0 0.0
  %399 = vmatprep.subr.mxu0 0.0
  %400 = vmatpush1.msra.mxu0 0.0
  %401 = vmatprep.subr.mxu0 0.0
  %402 = vmatpush1.msra.mxu0 0.0
  %403 = vmatprep.subr.mxu0 0.0
  %404 = vmatpush1.msra.mxu0 0.0
  %405 = vmatprep.subr.mxu0 0.0
  %406 = vmatpush1.msra.mxu0 0.0
  %407 = vmatprep.subr.mxu0 0.0
  %408 = vmatpush1.msra.mxu0 0.0
  %409 = vmatprep.subr.mxu0 0.0
  %410 = vmatpush1.msra.mxu0 0.0
  %411 = vmatprep.subr.mxu0 0.0
  %412 = vmatpush1.msra.mxu0 0.0
  %413 = vmatprep.subr.mxu0 0.0
  %414 = vmatpush1.msra.mxu0 0.0
  %415 = vmatprep.subr.mxu0 0.0
  %416 = vmatpush1.msra.mxu0 0.0
  %417 = vmatprep.subr.mxu0 0.0
  %418 = vmatpush1.msra.mxu0 0.0
  %419 = vmatprep.subr.mxu0 0.0
  %420 = vmatpush1.msra.mxu0 0.0
  %421 = vmatprep.subr.mxu0 0.0
  %422 = vmatpush1.msra.mxu0 0.0
  %423 = vmatprep.subr.mxu0 0.0
  %424 = vmatpush1.msra.mxu0 0.0
  %425 = vmatprep.subr.mxu0 0.0
  %426 = vmatpush1.msra.mxu0 0.0
  %427 = vmatprep.subr.mxu0 0.0
  %428 = vmatpush1.msra.mxu0 0.0
  %429 = vmatprep.subr.mxu0 0.0
  %430 = vmatpush1.msra.mxu0 0.0
  %431 = vmatprep.mubr.f32.mxu0 0.0
  %432 = vmatmul.mubr.f32.gmra.mrb[0].mxu0 %v365
  %v433 = vpop.f32.mrb[0].mxu0
  %v434 = vadd.f32 0.0, %v433
  %v435 = vpop.f32.mrb[0].mxu0
  %436 = vdwg.mxu0
  %v437 = vadd.f32 %v363, %v434
  %v438 = vxor.u32 %v437, 2147483648
  %v439 = vmul.f32 %v438, 1.442695
  %v440 = vpow.pop %v439
  %v441 = vadd.f32 %v440, 1.0
  %v442 = vrcp.pop %v441
  %v443 = vmul.f32 1.0, %v442
  %v444 = vtanh.pop %v437
  %v445 = vmul.f32 %v443, 0.0
  %447 = vrot.lane.b32.xlu0 %v444, 32
  %v448 = vpop.permute.xlu0 %447
  %v450 = vmul.f32 %v443, %v448
  %452 = vrot.lane.b32.xlu0 %v450, 32
  %v453 = vpop.permute.xlu0 %452
  %v455 = vadd.f32 %v445, %v453
  %v456 = vtanh.pop %v455
  %458 = vrot.lane.b32.xlu0 %v456, 32
  %v459 = vpop.permute.xlu0 %458
  %v461 = vmul.f32 %v443, %v459
  %463 = vrot.lane.b32.xlu0 %v461, 64
  %v464 = vpop.permute.xlu0 %463
  %466 = vst.msk [vmem:[#allocation3] sm:$0xff] %vm221, %v464
  %s467 = scalar_lea.vmem [#allocation2], 8
  %v468 = vld [vmem:[%s467] sm:$0xff]
  %v469 = vsel %vm221, %v464, 0
  %471 = vmatprep.subr.mxu0 0.0
  %472 = vmatpush1.msra.mxu0 %v359
  %473 = vmatprep.subr.mxu0 0.0
  %474 = vmatpush1.msra.mxu0 %v360
  %475 = vmatprep.subr.mxu0 0.0
  %476 = vmatpush1.msra.mxu0 %v361
  %477 = vmatprep.subr.mxu0 0.0
  %478 = vmatpush1.msra.mxu0 %v362
  %479 = vmatprep.subr.mxu0 0.0
  %480 = vmatpush1.msra.mxu0 0.0
  %481 = vmatprep.subr.mxu0 0.0
  %482 = vmatpush1.msra.mxu0 0.0
  %483 = vmatprep.subr.mxu0 0.0
  %484 = vmatpush1.msra.mxu0 0.0
  %485 = vmatprep.subr.mxu0 0.0
  %486 = vmatpush1.msra.mxu0 0.0
  %487 = vmatprep.subr.mxu0 0.0
  %488 = vmatpush1.msra.mxu0 0.0
  %489 = vmatprep.subr.mxu0 0.0
  %490 = vmatpush1.msra.mxu0 0.0
  %491 = vmatprep.subr.mxu0 0.0
  %492 = vmatpush1.msra.mxu0 0.0
  %493 = vmatprep.subr.mxu0 0.0
  %494 = vmatpush1.msra.mxu0 0.0
  %495 = vmatprep.subr.mxu0 0.0
  %496 = vmatpush1.msra.mxu0 0.0
  %497 = vmatprep.subr.mxu0 0.0
  %498 = vmatpush1.msra.mxu0 0.0
  %499 = vmatprep.subr.mxu0 0.0
  %500 = vmatpush1.msra.mxu0 0.0
  %501 = vmatprep.subr.mxu0 0.0
  %502 = vmatpush1.msra.mxu0 0.0
  %503 = vmatprep.subr.mxu0 0.0
  %504 = vmatpush1.msra.mxu0 0.0
  %505 = vmatprep.subr.mxu0 0.0
  %506 = vmatpush1.msra.mxu0 0.0
  %507 = vmatprep.subr.mxu0 0.0
  %508 = vmatpush1.msra.mxu0 0.0
  %509 = vmatprep.subr.mxu0 0.0
  %510 = vmatpush1.msra.mxu0 0.0
  %511 = vmatprep.subr.mxu0 0.0
  %512 = vmatpush1.msra.mxu0 0.0
  %513 = vmatprep.subr.mxu0 0.0
  %514 = vmatpush1.msra.mxu0 0.0
  %515 = vmatprep.subr.mxu0 0.0
  %516 = vmatpush1.msra.mxu0 0.0
  %517 = vmatprep.subr.mxu0 0.0
  %518 = vmatpush1.msra.mxu0 0.0
  %519 = vmatprep.subr.mxu0 0.0
  %520 = vmatpush1.msra.mxu0 0.0
  %521 = vmatprep.subr.mxu0 0.0
  %522 = vmatpush1.msra.mxu0 0.0
  %523 = vmatprep.subr.mxu0 0.0
  %524 = vmatpush1.msra.mxu0 0.0
  %525 = vmatprep.subr.mxu0 0.0
  %526 = vmatpush1.msra.mxu0 0.0
  %527 = vmatprep.subr.mxu0 0.0
  %528 = vmatpush1.msra.mxu0 0.0
  %529 = vmatprep.subr.mxu0 0.0
  %530 = vmatpush1.msra.mxu0 0.0
  %531 = vmatprep.subr.mxu0 0.0
  %532 = vmatpush1.msra.mxu0 0.0
  %533 = vmatprep.subr.mxu0 0.0
  %534 = vmatpush1.msra.mxu0 0.0
  %535 = vmatprep.mubr.f32.mxu0 0.0
  %536 = vmatmul.mubr.f32.gmra.mrb[0].mxu0 %v469
  %v537 = vpop.f32.mrb[0].mxu0
  %v538 = vadd.f32 0.0, %v537
  %v539 = vpop.f32.mrb[0].mxu0
  %540 = vdwg.mxu0
  %v541 = vadd.f32 %v468, %v538
  %v542 = vxor.u32 %v541, 2147483648
  %v543 = vmul.f32 %v542, 1.442695
  %v544 = vpow.pop %v543
  %v545 = vadd.f32 %v544, 1.0
  %v546 = vrcp.pop %v545
  %v547 = vmul.f32 1.0, %v546
  %v548 = vtanh.pop %v541
  %v549 = vmul.f32 %v547, %v455
  %551 = vrot.lane.b32.xlu0 %v548, 32
  %v552 = vpop.permute.xlu0 %551
  %v554 = vmul.f32 %v547, %v552
  %556 = vrot.lane.b32.xlu0 %v554, 32
  %v557 = vpop.permute.xlu0 %556
  %v559 = vadd.f32 %v549, %v557
  %v560 = vtanh.pop %v559
  %562 = vrot.lane.b32.xlu0 %v560, 32
  %v563 = vpop.permute.xlu0 %562
  %v565 = vmul.f32 %v547, %v563
  %567 = vrot.lane.b32.xlu0 %v565, 64
  %v568 = vpop.permute.xlu0 %567
  %s570 = scalar_lea.vmem [#allocation3], 8
  %571 = vst.msk [vmem:[%s570] sm:$0xff] %vm221, %v568
  %s572 = scalar_lea.vmem [#allocation2], 16
  %v573 = vld [vmem:[%s572] sm:$0xff]
  %v574 = vsel %vm221, %v568, 0
  %576 = vmatprep.subr.mxu0 0.0
  %577 = vmatpush1.msra.mxu0 %v359
  %578 = vmatprep.subr.mxu0 0.0
  %579 = vmatpush1.msra.mxu0 %v360
  %580 = vmatprep.subr.mxu0 0.0
  %581 = vmatpush1.msra.mxu0 %v361
  %582 = vmatprep.subr.mxu0 0.0
  %583 = vmatpush1.msra.mxu0 %v362
  %584 = vmatprep.subr.mxu0 0.0
  %585 = vmatpush1.msra.mxu0 0.0
  %586 = vmatprep.subr.mxu0 0.0
  %587 = vmatpush1.msra.mxu0 0.0
  %588 = vmatprep.subr.mxu0 0.0
  %589 = vmatpush1.msra.mxu0 0.0
  %590 = vmatprep.subr.mxu0 0.0
  %591 = vmatpush1.msra.mxu0 0.0
  %592 = vmatprep.subr.mxu0 0.0
  %593 = vmatpush1.msra.mxu0 0.0
  %594 = vmatprep.subr.mxu0 0.0
  %595 = vmatpush1.msra.mxu0 0.0
  %596 = vmatprep.subr.mxu0 0.0
  %597 = vmatpush1.msra.mxu0 0.0
  %598 = vmatprep.subr.mxu0 0.0
  %599 = vmatpush1.msra.mxu0 0.0
  %600 = vmatprep.subr.mxu0 0.0
  %601 = vmatpush1.msra.mxu0 0.0
  %602 = vmatprep.subr.mxu0 0.0
  %603 = vmatpush1.msra.mxu0 0.0
  %604 = vmatprep.subr.mxu0 0.0
  %605 = vmatpush1.msra.mxu0 0.0
  %606 = vmatprep.subr.mxu0 0.0
  %607 = vmatpush1.msra.mxu0 0.0
  %608 = vmatprep.subr.mxu0 0.0
  %609 = vmatpush1.msra.mxu0 0.0
  %610 = vmatprep.subr.mxu0 0.0
  %611 = vmatpush1.msra.mxu0 0.0
  %612 = vmatprep.subr.mxu0 0.0
  %613 = vmatpush1.msra.mxu0 0.0
  %614 = vmatprep.subr.mxu0 0.0
  %615 = vmatpush1.msra.mxu0 0.0
  %616 = vmatprep.subr.mxu0 0.0
  %617 = vmatpush1.msra.mxu0 0.0
  %618 = vmatprep.subr.mxu0 0.0
  %619 = vmatpush1.msra.mxu0 0.0
  %620 = vmatprep.subr.mxu0 0.0
  %621 = vmatpush1.msra.mxu0 0.0
  %622 = vmatprep.subr.mxu0 0.0
  %623 = vmatpush1.msra.mxu0 0.0
  %624 = vmatprep.subr.mxu0 0.0
  %625 = vmatpush1.msra.mxu0 0.0
  %626 = vmatprep.subr.mxu0 0.0
  %627 = vmatpush1.msra.mxu0 0.0
  %628 = vmatprep.subr.mxu0 0.0
  %629 = vmatpush1.msra.mxu0 0.0
  %630 = vmatprep.subr.mxu0 0.0
  %631 = vmatpush1.msra.mxu0 0.0
  %632 = vmatprep.subr.mxu0 0.0
  %633 = vmatpush1.msra.mxu0 0.0
  %634 = vmatprep.subr.mxu0 0.0
  %635 = vmatpush1.msra.mxu0 0.0
  %636 = vmatprep.subr.mxu0 0.0
  %637 = vmatpush1.msra.mxu0 0.0
  %638 = vmatprep.subr.mxu0 0.0
  %639 = vmatpush1.msra.mxu0 0.0
  %640 = vmatprep.mubr.f32.mxu0 0.0
  %641 = vmatmul.mubr.f32.gmra.mrb[0].mxu0 %v574
  %v642 = vpop.f32.mrb[0].mxu0
  %v643 = vadd.f32 0.0, %v642
  %v644 = vpop.f32.mrb[0].mxu0
  %645 = vdwg.mxu0
  %v646 = vadd.f32 %v573, %v643
  %v647 = vxor.u32 %v646, 2147483648
  %v648 = vmul.f32 %v647, 1.442695
  %v649 = vpow.pop %v648
  %v650 = vadd.f32 %v649, 1.0
  %v651 = vrcp.pop %v650
  %v652 = vmul.f32 1.0, %v651
  %v653 = vtanh.pop %v646
  %v654 = vmul.f32 %v652, %v559
  %656 = vrot.lane.b32.xlu0 %v653, 32
  %v657 = vpop.permute.xlu0 %656
  %v659 = vmul.f32 %v652, %v657
  %661 = vrot.lane.b32.xlu0 %v659, 32
  %v662 = vpop.permute.xlu0 %661
  %v664 = vadd.f32 %v654, %v662
  %v665 = vtanh.pop %v664
  %667 = vrot.lane.b32.xlu0 %v665, 32
  %v668 = vpop.permute.xlu0 %667
  %v670 = vmul.f32 %v652, %v668
  %672 = vrot.lane.b32.xlu0 %v670, 64
  %v673 = vpop.permute.xlu0 %672
  %s675 = scalar_lea.vmem [#allocation3], 16
  %676 = vst.msk [vmem:[%s675] sm:$0xff] %vm221, %v673
  %s677 = scalar_lea.vmem [#allocation2], 24
  %v678 = vld [vmem:[%s677] sm:$0xff]
  %v679 = vsel %vm221, %v673, 0
  %681 = vmatprep.subr.mxu0 0.0
  %682 = vmatpush1.msra.mxu0 %v359
  %683 = vmatprep.subr.mxu0 0.0
  %684 = vmatpush1.msra.mxu0 %v360
  %685 = vmatprep.subr.mxu0 0.0
  %686 = vmatpush1.msra.mxu0 %v361
  %687 = vmatprep.subr.mxu0 0.0
  %688 = vmatpush1.msra.mxu0 %v362
  %689 = vmatprep.subr.mxu0 0.0
  %690 = vmatpush1.msra.mxu0 0.0
  %691 = vmatprep.subr.mxu0 0.0
  %692 = vmatpush1.msra.mxu0 0.0
  %693 = vmatprep.subr.mxu0 0.0
  %694 = vmatpush1.msra.mxu0 0.0
  %695 = vmatprep.subr.mxu0 0.0
  %696 = vmatpush1.msra.mxu0 0.0
  %697 = vmatprep.subr.mxu0 0.0
  %698 = vmatpush1.msra.mxu0 0.0
  %699 = vmatprep.subr.mxu0 0.0
  %700 = vmatpush1.msra.mxu0 0.0
  %701 = vmatprep.subr.mxu0 0.0
  %702 = vmatpush1.msra.mxu0 0.0
  %703 = vmatprep.subr.mxu0 0.0
  %704 = vmatpush1.msra.mxu0 0.0
  %705 = vmatprep.subr.mxu0 0.0
  %706 = vmatpush1.msra.mxu0 0.0
  %707 = vmatprep.subr.mxu0 0.0
  %708 = vmatpush1.msra.mxu0 0.0
  %709 = vmatprep.subr.mxu0 0.0
  %710 = vmatpush1.msra.mxu0 0.0
  %711 = vmatprep.subr.mxu0 0.0
  %712 = vmatpush1.msra.mxu0 0.0
  %713 = vmatprep.subr.mxu0 0.0
  %714 = vmatpush1.msra.mxu0 0.0
  %715 = vmatprep.subr.mxu0 0.0
  %716 = vmatpush1.msra.mxu0 0.0
  %717 = vmatprep.subr.mxu0 0.0
  %718 = vmatpush1.msra.mxu0 0.0
  %719 = vmatprep.subr.mxu0 0.0
  %720 = vmatpush1.msra.mxu0 0.0
  %721 = vmatprep.subr.mxu0 0.0
  %722 = vmatpush1.msra.mxu0 0.0
  %723 = vmatprep.subr.mxu0 0.0
  %724 = vmatpush1.msra.mxu0 0.0
  %725 = vmatprep.subr.mxu0 0.0
  %726 = vmatpush1.msra.mxu0 0.0
  %727 = vmatprep.subr.mxu0 0.0
  %728 = vmatpush1.msra.mxu0 0.0
  %729 = vmatprep.subr.mxu0 0.0
  %730 = vmatpush1.msra.mxu0 0.0
  %731 = vmatprep.subr.mxu0 0.0
  %732 = vmatpush1.msra.mxu0 0.0
  %733 = vmatprep.subr.mxu0 0.0
  %734 = vmatpush1.msra.mxu0 0.0
  %735 = vmatprep.subr.mxu0 0.0
  %736 = vmatpush1.msra.mxu0 0.0
  %737 = vmatprep.subr.mxu0 0.0
  %738 = vmatpush1.msra.mxu0 0.0
  %739 = vmatprep.subr.mxu0 0.0
  %740 = vmatpush1.msra.mxu0 0.0
  %741 = vmatprep.subr.mxu0 0.0
  %742 = vmatpush1.msra.mxu0 0.0
  %743 = vmatprep.subr.mxu0 0.0
  %744 = vmatpush1.msra.mxu0 0.0
  %745 = vmatprep.mubr.f32.mxu0 0.0
  %746 = vmatmul.mubr.f32.gmra.mrb[0].mxu0 %v679
  %v747 = vpop.f32.mrb[0].mxu0
  %v748 = vadd.f32 0.0, %v747
  %v749 = vpop.f32.mrb[0].mxu0
  %750 = vdwg.mxu0
  %v751 = vadd.f32 %v678, %v748
  %v752 = vxor.u32 %v751, 2147483648
  %v753 = vmul.f32 %v752, 1.442695
  %v754 = vpow.pop %v753
  %v755 = vadd.f32 %v754, 1.0
  %v756 = vrcp.pop %v755
  %v757 = vmul.f32 1.0, %v756
  %v758 = vtanh.pop %v751
  %v759 = vmul.f32 %v757, %v664
  %761 = vrot.lane.b32.xlu0 %v758, 32
  %v762 = vpop.permute.xlu0 %761
  %v764 = vmul.f32 %v757, %v762
  %766 = vrot.lane.b32.xlu0 %v764, 32
  %v767 = vpop.permute.xlu0 %766
  %v769 = vadd.f32 %v759, %v767
  %v770 = vtanh.pop %v769
  %772 = vrot.lane.b32.xlu0 %v770, 32
  %v773 = vpop.permute.xlu0 %772
  %v775 = vmul.f32 %v757, %v773
  %777 = vrot.lane.b32.xlu0 %v775, 64
  %v778 = vpop.permute.xlu0 %777
  %s780 = scalar_lea.vmem [#allocation3], 24
  %781 = vst.msk [vmem:[%s780] sm:$0xff] %vm221, %v778
  %s782 = scalar_lea.vmem [#allocation2], 32
  %v783 = vld [vmem:[%s782] sm:$0xff]
  %v784 = vsel %vm221, %v778, 0
  %786 = vmatprep.subr.mxu0 0.0
  %787 = vmatpush1.msra.mxu0 %v359
  %788 = vmatprep.subr.mxu0 0.0
  %789 = vmatpush1.msra.mxu0 %v360
  %790 = vmatprep.subr.mxu0 0.0
  %791 = vmatpush1.msra.mxu0 %v361
  %792 = vmatprep.subr.mxu0 0.0
  %793 = vmatpush1.msra.mxu0 %v362
  %794 = vmatprep.subr.mxu0 0.0
  %795 = vmatpush1.msra.mxu0 0.0
  %796 = vmatprep.subr.mxu0 0.0
  %797 = vmatpush1.msra.mxu0 0.0
  %798 = vmatprep.subr.mxu0 0.0
  %799 = vmatpush1.msra.mxu0 0.0
  %800 = vmatprep.subr.mxu0 0.0
  %801 = vmatpush1.msra.mxu0 0.0
  %802 = vmatprep.subr.mxu0 0.0
  %803 = vmatpush1.msra.mxu0 0.0
  %804 = vmatprep.subr.mxu0 0.0
  %805 = vmatpush1.msra.mxu0 0.0
  %806 = vmatprep.subr.mxu0 0.0
  %807 = vmatpush1.msra.mxu0 0.0
  %808 = vmatprep.subr.mxu0 0.0
  %809 = vmatpush1.msra.mxu0 0.0
  %810 = vmatprep.subr.mxu0 0.0
  %811 = vmatpush1.msra.mxu0 0.0
  %812 = vmatprep.subr.mxu0 0.0
  %813 = vmatpush1.msra.mxu0 0.0
  %814 = vmatprep.subr.mxu0 0.0
  %815 = vmatpush1.msra.mxu0 0.0
  %816 = vmatprep.subr.mxu0 0.0
  %817 = vmatpush1.msra.mxu0 0.0
  %818 = vmatprep.subr.mxu0 0.0
  %819 = vmatpush1.msra.mxu0 0.0
  %820 = vmatprep.subr.mxu0 0.0
  %821 = vmatpush1.msra.mxu0 0.0
  %822 = vmatprep.subr.mxu0 0.0
  %823 = vmatpush1.msra.mxu0 0.0
  %824 = vmatprep.subr.mxu0 0.0
  %825 = vmatpush1.msra.mxu0 0.0
  %826 = vmatprep.subr.mxu0 0.0
  %827 = vmatpush1.msra.mxu0 0.0
  %828 = vmatprep.subr.mxu0 0.0
  %829 = vmatpush1.msra.mxu0 0.0
  %830 = vmatprep.subr.mxu0 0.0
  %831 = vmatpush1.msra.mxu0 0.0
  %832 = vmatprep.subr.mxu0 0.0
  %833 = vmatpush1.msra.mxu0 0.0
  %834 = vmatprep.subr.mxu0 0.0
  %835 = vmatpush1.msra.mxu0 0.0
  %836 = vmatprep.subr.mxu0 0.0
  %837 = vmatpush1.msra.mxu0 0.0
  %838 = vmatprep.subr.mxu0 0.0
  %839 = vmatpush1.msra.mxu0 0.0
  %840 = vmatprep.subr.mxu0 0.0
  %841 = vmatpush1.msra.mxu0 0.0
  %842 = vmatprep.subr.mxu0 0.0
  %843 = vmatpush1.msra.mxu0 0.0
  %844 = vmatprep.subr.mxu0 0.0
  %845 = vmatpush1.msra.mxu0 0.0
  %846 = vmatprep.subr.mxu0 0.0
  %847 = vmatpush1.msra.mxu0 0.0
  %848 = vmatprep.subr.mxu0 0.0
  %849 = vmatpush1.msra.mxu0 0.0
  %850 = vmatprep.mubr.f32.mxu0 0.0
  %851 = vmatmul.mubr.f32.gmra.mrb[0].mxu0 %v784
  %v852 = vpop.f32.mrb[0].mxu0
  %v853 = vadd.f32 0.0, %v852
  %v854 = vpop.f32.mrb[0].mxu0
  %855 = vdwg.mxu0
  %v856 = vadd.f32 %v783, %v853
  %v857 = vxor.u32 %v856, 2147483648
  %v858 = vmul.f32 %v857, 1.442695
  %v859 = vpow.pop %v858
  %v860 = vadd.f32 %v859, 1.0
  %v861 = vrcp.pop %v860
  %v862 = vmul.f32 1.0, %v861
  %v863 = vtanh.pop %v856
  %v864 = vmul.f32 %v862, %v769
  %866 = vrot.lane.b32.xlu0 %v863, 32
  %v867 = vpop.permute.xlu0 %866
  %v869 = vmul.f32 %v862, %v867
  %871 = vrot.lane.b32.xlu0 %v869, 32
  %v872 = vpop.permute.xlu0 %871
  %v874 = vadd.f32 %v864, %v872
  %v875 = vtanh.pop %v874
  %877 = vrot.lane.b32.xlu0 %v875, 32
  %v878 = vpop.permute.xlu0 %877
  %v880 = vmul.f32 %v862, %v878
  %882 = vrot.lane.b32.xlu0 %v880, 64
  %v883 = vpop.permute.xlu0 %882
  %s885 = scalar_lea.vmem [#allocation3], 32
  %886 = vst.msk [vmem:[%s885] sm:$0xff] %vm221, %v883
  %s887 = scalar_lea.vmem [#allocation2], 40
  %v888 = vld [vmem:[%s887] sm:$0xff]
  %v889 = vsel %vm221, %v883, 0
  %891 = vmatprep.subr.mxu0 0.0
  %892 = vmatpush1.msra.mxu0 %v359
  %893 = vmatprep.subr.mxu0 0.0
  %894 = vmatpush1.msra.mxu0 %v360
  %895 = vmatprep.subr.mxu0 0.0
  %896 = vmatpush1.msra.mxu0 %v361
  %897 = vmatprep.subr.mxu0 0.0
  %898 = vmatpush1.msra.mxu0 %v362
  %899 = vmatprep.subr.mxu0 0.0
  %900 = vmatpush1.msra.mxu0 0.0
  %901 = vmatprep.subr.mxu0 0.0
  %902 = vmatpush1.msra.mxu0 0.0
  %903 = vmatprep.subr.mxu0 0.0
  %904 = vmatpush1.msra.mxu0 0.0
  %905 = vmatprep.subr.mxu0 0.0
  %906 = vmatpush1.msra.mxu0 0.0
  %907 = vmatprep.subr.mxu0 0.0
  %908 = vmatpush1.msra.mxu0 0.0
  %909 = vmatprep.subr.mxu0 0.0
  %910 = vmatpush1.msra.mxu0 0.0
  %911 = vmatprep.subr.mxu0 0.0
  %912 = vmatpush1.msra.mxu0 0.0
  %913 = vmatprep.subr.mxu0 0.0
  %914 = vmatpush1.msra.mxu0 0.0
  %915 = vmatprep.subr.mxu0 0.0
  %916 = vmatpush1.msra.mxu0 0.0
  %917 = vmatprep.subr.mxu0 0.0
  %918 = vmatpush1.msra.mxu0 0.0
  %919 = vmatprep.subr.mxu0 0.0
  %920 = vmatpush1.msra.mxu0 0.0
  %921 = vmatprep.subr.mxu0 0.0
  %922 = vmatpush1.msra.mxu0 0.0
  %923 = vmatprep.subr.mxu0 0.0
  %924 = vmatpush1.msra.mxu0 0.0
  %925 = vmatprep.subr.mxu0 0.0
  %926 = vmatpush1.msra.mxu0 0.0
  %927 = vmatprep.subr.mxu0 0.0
  %928 = vmatpush1.msra.mxu0 0.0
  %929 = vmatprep.subr.mxu0 0.0
  %930 = vmatpush1.msra.mxu0 0.0
  %931 = vmatprep.subr.mxu0 0.0
  %932 = vmatpush1.msra.mxu0 0.0
  %933 = vmatprep.subr.mxu0 0.0
  %934 = vmatpush1.msra.mxu0 0.0
  %935 = vmatprep.subr.mxu0 0.0
  %936 = vmatpush1.msra.mxu0 0.0
  %937 = vmatprep.subr.mxu0 0.0
  %938 = vmatpush1.msra.mxu0 0.0
  %939 = vmatprep.subr.mxu0 0.0
  %940 = vmatpush1.msra.mxu0 0.0
  %941 = vmatprep.subr.mxu0 0.0
  %942 = vmatpush1.msra.mxu0 0.0
  %943 = vmatprep.subr.mxu0 0.0
  %944 = vmatpush1.msra.mxu0 0.0
  %945 = vmatprep.subr.mxu0 0.0
  %946 = vmatpush1.msra.mxu0 0.0
  %947 = vmatprep.subr.mxu0 0.0
  %948 = vmatpush1.msra.mxu0 0.0
  %949 = vmatprep.subr.mxu0 0.0
  %950 = vmatpush1.msra.mxu0 0.0
  %951 = vmatprep.subr.mxu0 0.0
  %952 = vmatpush1.msra.mxu0 0.0
  %953 = vmatprep.subr.mxu0 0.0
  %954 = vmatpush1.msra.mxu0 0.0
  %955 = vmatprep.mubr.f32.mxu0 0.0
  %956 = vmatmul.mubr.f32.gmra.mrb[0].mxu0 %v889
  %v957 = vpop.f32.mrb[0].mxu0
  %v958 = vadd.f32 0.0, %v957
  %v959 = vpop.f32.mrb[0].mxu0
  %960 = vdwg.mxu0
  %v961 = vadd.f32 %v888, %v958
  %v962 = vxor.u32 %v961, 2147483648
  %v963 = vmul.f32 %v962, 1.442695
  %v964 = vpow.pop %v963
  %v965 = vadd.f32 %v964, 1.0
  %v966 = vrcp.pop %v965
  %v967 = vmul.f32 1.0, %v966
  %v968 = vtanh.pop %v961
  %v969 = vmul.f32 %v967, %v874
  %971 = vrot.lane.b32.xlu0 %v968, 32
  %v972 = vpop.permute.xlu0 %971
  %v974 = vmul.f32 %v967, %v972
  %976 = vrot.lane.b32.xlu0 %v974, 32
  %v977 = vpop.permute.xlu0 %976
  %v979 = vadd.f32 %v969, %v977
  %v980 = vtanh.pop %v979
  %982 = vrot.lane.b32.xlu0 %v980, 32
  %v983 = vpop.permute.xlu0 %982
  %v985 = vmul.f32 %v967, %v983
  %987 = vrot.lane.b32.xlu0 %v985, 64
  %v988 = vpop.permute.xlu0 %987
  %s990 = scalar_lea.vmem [#allocation3], 40
  %991 = vst.msk [vmem:[%s990] sm:$0xff] %vm221, %v988
  %s992 = scalar_lea.vmem [#allocation2], 48
  %v993 = vld [vmem:[%s992] sm:$0xff]
  %v994 = vsel %vm221, %v988, 0
  %996 = vmatprep.subr.mxu0 0.0
  %997 = vmatpush1.msra.mxu0 %v359
  %998 = vmatprep.subr.mxu0 0.0
  %999 = vmatpush1.msra.mxu0 %v360
  %1000 = vmatprep.subr.mxu0 0.0
  %1001 = vmatpush1.msra.mxu0 %v361
  %1002 = vmatprep.subr.mxu0 0.0
  %1003 = vmatpush1.msra.mxu0 %v362
  %1004 = vmatprep.subr.mxu0 0.0
  %1005 = vmatpush1.msra.mxu0 0.0
  %1006 = vmatprep.subr.mxu0 0.0
  %1007 = vmatpush1.msra.mxu0 0.0
  %1008 = vmatprep.subr.mxu0 0.0
  %1009 = vmatpush1.msra.mxu0 0.0
  %1010 = vmatprep.subr.mxu0 0.0
  %1011 = vmatpush1.msra.mxu0 0.0
  %1012 = vmatprep.subr.mxu0 0.0
  %1013 = vmatpush1.msra.mxu0 0.0
  %1014 = vmatprep.subr.mxu0 0.0
  %1015 = vmatpush1.msra.mxu0 0.0
  %1016 = vmatprep.subr.mxu0 0.0
  %1017 = vmatpush1.msra.mxu0 0.0
  %1018 = vmatprep.subr.mxu0 0.0
  %1019 = vmatpush1.msra.mxu0 0.0
  %1020 = vmatprep.subr.mxu0 0.0
  %1021 = vmatpush1.msra.mxu0 0.0
  %1022 = vmatprep.subr.mxu0 0.0
  %1023 = vmatpush1.msra.mxu0 0.0
  %1024 = vmatprep.subr.mxu0 0.0
  %1025 = vmatpush1.msra.mxu0 0.0
  %1026 = vmatprep.subr.mxu0 0.0
  %1027 = vmatpush1.msra.mxu0 0.0
  %1028 = vmatprep.subr.mxu0 0.0
  %1029 = vmatpush1.msra.mxu0 0.0
  %1030 = vmatprep.subr.mxu0 0.0
  %1031 = vmatpush1.msra.mxu0 0.0
  %1032 = vmatprep.subr.mxu0 0.0
  %1033 = vmatpush1.msra.mxu0 0.0
  %1034 = vmatprep.subr.mxu0 0.0
  %1035 = vmatpush1.msra.mxu0 0.0
  %1036 = vmatprep.subr.mxu0 0.0
  %1037 = vmatpush1.msra.mxu0 0.0
  %1038 = vmatprep.subr.mxu0 0.0
  %1039 = vmatpush1.msra.mxu0 0.0
  %1040 = vmatprep.subr.mxu0 0.0
  %1041 = vmatpush1.msra.mxu0 0.0
  %1042 = vmatprep.subr.mxu0 0.0
  %1043 = vmatpush1.msra.mxu0 0.0
  %1044 = vmatprep.subr.mxu0 0.0
  %1045 = vmatpush1.msra.mxu0 0.0
  %1046 = vmatprep.subr.mxu0 0.0
  %1047 = vmatpush1.msra.mxu0 0.0
  %1048 = vmatprep.subr.mxu0 0.0
  %1049 = vmatpush1.msra.mxu0 0.0
  %1050 = vmatprep.subr.mxu0 0.0
  %1051 = vmatpush1.msra.mxu0 0.0
  %1052 = vmatprep.subr.mxu0 0.0
  %1053 = vmatpush1.msra.mxu0 0.0
  %1054 = vmatprep.subr.mxu0 0.0
  %1055 = vmatpush1.msra.mxu0 0.0
  %1056 = vmatprep.subr.mxu0 0.0
  %1057 = vmatpush1.msra.mxu0 0.0
  %1058 = vmatprep.subr.mxu0 0.0
  %1059 = vmatpush1.msra.mxu0 0.0
  %1060 = vmatprep.mubr.f32.mxu0 0.0
  %1061 = vmatmul.mubr.f32.gmra.mrb[0].mxu0 %v994
  %v1062 = vpop.f32.mrb[0].mxu0
  %v1063 = vadd.f32 0.0, %v1062
  %v1064 = vpop.f32.mrb[0].mxu0
  %1065 = vdwg.mxu0
  %v1066 = vadd.f32 %v993, %v1063
  %v1067 = vxor.u32 %v1066, 2147483648
  %v1068 = vmul.f32 %v1067, 1.442695
  %v1069 = vpow.pop %v1068
  %v1070 = vadd.f32 %v1069, 1.0
  %v1071 = vrcp.pop %v1070
  %v1072 = vmul.f32 1.0, %v1071
  %v1073 = vtanh.pop %v1066
  %v1074 = vmul.f32 %v1072, %v979
  %1076 = vrot.lane.b32.xlu0 %v1073, 32
  %v1077 = vpop.permute.xlu0 %1076
  %v1079 = vmul.f32 %v1072, %v1077
  %1081 = vrot.lane.b32.xlu0 %v1079, 32
  %v1082 = vpop.permute.xlu0 %1081
  %v1084 = vadd.f32 %v1074, %v1082
  %v1085 = vtanh.pop %v1084
  %1087 = vrot.lane.b32.xlu0 %v1085, 32
  %v1088 = vpop.permute.xlu0 %1087
  %v1090 = vmul.f32 %v1072, %v1088
  %1092 = vrot.lane.b32.xlu0 %v1090, 64
  %v1093 = vpop.permute.xlu0 %1092
  %s1095 = scalar_lea.vmem [#allocation3], 48
  %1096 = vst.msk [vmem:[%s1095] sm:$0xff] %vm221, %v1093
  %s1097 = scalar_lea.vmem [#allocation2], 56
  %v1098 = vld [vmem:[%s1097] sm:$0xff]
  %v1099 = vsel %vm221, %v1093, 0
  %1101 = vmatprep.subr.mxu0 0.0
  %1102 = vmatpush1.msra.mxu0 %v359
  %1103 = vmatprep.subr.mxu0 0.0
  %1104 = vmatpush1.msra.mxu0 %v360
  %1105 = vmatprep.subr.mxu0 0.0
  %1106 = vmatpush1.msra.mxu0 %v361
  %1107 = vmatprep.subr.mxu0 0.0
  %1108 = vmatpush1.msra.mxu0 %v362
  %1109 = vmatprep.subr.mxu0 0.0
  %1110 = vmatpush1.msra.mxu0 0.0
  %1111 = vmatprep.subr.mxu0 0.0
  %1112 = vmatpush1.msra.mxu0 0.0
  %1113 = vmatprep.subr.mxu0 0.0
  %1114 = vmatpush1.msra.mxu0 0.0
  %1115 = vmatprep.subr.mxu0 0.0
  %1116 = vmatpush1.msra.mxu0 0.0
  %1117 = vmatprep.subr.mxu0 0.0
  %1118 = vmatpush1.msra.mxu0 0.0
  %1119 = vmatprep.subr.mxu0 0.0
  %1120 = vmatpush1.msra.mxu0 0.0
  %1121 = vmatprep.subr.mxu0 0.0
  %1122 = vmatpush1.msra.mxu0 0.0
  %1123 = vmatprep.subr.mxu0 0.0
  %1124 = vmatpush1.msra.mxu0 0.0
  %1125 = vmatprep.subr.mxu0 0.0
  %1126 = vmatpush1.msra.mxu0 0.0
  %1127 = vmatprep.subr.mxu0 0.0
  %1128 = vmatpush1.msra.mxu0 0.0
  %1129 = vmatprep.subr.mxu0 0.0
  %1130 = vmatpush1.msra.mxu0 0.0
  %1131 = vmatprep.subr.mxu0 0.0
  %1132 = vmatpush1.msra.mxu0 0.0
  %1133 = vmatprep.subr.mxu0 0.0
  %1134 = vmatpush1.msra.mxu0 0.0
  %1135 = vmatprep.subr.mxu0 0.0
  %1136 = vmatpush1.msra.mxu0 0.0
  %1137 = vmatprep.subr.mxu0 0.0
  %1138 = vmatpush1.msra.mxu0 0.0
  %1139 = vmatprep.subr.mxu0 0.0
  %1140 = vmatpush1.msra.mxu0 0.0
  %1141 = vmatprep.subr.mxu0 0.0
  %1142 = vmatpush1.msra.mxu0 0.0
  %1143 = vmatprep.subr.mxu0 0.0
  %1144 = vmatpush1.msra.mxu0 0.0
  %1145 = vmatprep.subr.mxu0 0.0
  %1146 = vmatpush1.msra.mxu0 0.0
  %1147 = vmatprep.subr.mxu0 0.0
  %1148 = vmatpush1.msra.mxu0 0.0
  %1149 = vmatprep.subr.mxu0 0.0
  %1150 = vmatpush1.msra.mxu0 0.0
  %1151 = vmatprep.subr.mxu0 0.0
  %1152 = vmatpush1.msra.mxu0 0.0
  %1153 = vmatprep.subr.mxu0 0.0
  %1154 = vmatpush1.msra.mxu0 0.0
  %1155 = vmatprep.subr.mxu0 0.0
  %1156 = vmatpush1.msra.mxu0 0.0
  %1157 = vmatprep.subr.mxu0 0.0
  %1158 = vmatpush1.msra.mxu0 0.0
  %1159 = vmatprep.subr.mxu0 0.0
  %1160 = vmatpush1.msra.mxu0 0.0
  %1161 = vmatprep.subr.mxu0 0.0
  %1162 = vmatpush1.msra.mxu0 0.0
  %1163 = vmatprep.subr.mxu0 0.0
  %1164 = vmatpush1.msra.mxu0 0.0
  %1165 = vmatprep.mubr.f32.mxu0 0.0
  %1166 = vmatmul.mubr.f32.gmra.mrb[0].mxu0 %v1099
  %v1167 = vpop.f32.mrb[0].mxu0
  %v1168 = vadd.f32 0.0, %v1167
  %v1169 = vpop.f32.mrb[0].mxu0
  %1170 = vdwg.mxu0
  %v1171 = vadd.f32 %v1098, %v1168
  %v1172 = vxor.u32 %v1171, 2147483648
  %v1173 = vmul.f32 %v1172, 1.442695
  %v1174 = vpow.pop %v1173
  %v1175 = vadd.f32 %v1174, 1.0
  %v1176 = vrcp.pop %v1175
  %v1177 = vmul.f32 1.0, %v1176
  %v1178 = vtanh.pop %v1171
  %v1179 = vmul.f32 %v1177, %v1084
  %1181 = vrot.lane.b32.xlu0 %v1178, 32
  %v1182 = vpop.permute.xlu0 %1181
  %v1184 = vmul.f32 %v1177, %v1182
  %1186 = vrot.lane.b32.xlu0 %v1184, 32
  %v1187 = vpop.permute.xlu0 %1186
  %v1189 = vadd.f32 %v1179, %v1187
  %v1190 = vtanh.pop %v1189
  %1192 = vrot.lane.b32.xlu0 %v1190, 32
  %v1193 = vpop.permute.xlu0 %1192
  %v1195 = vmul.f32 %v1177, %v1193
  %1197 = vrot.lane.b32.xlu0 %v1195, 64
  %v1198 = vpop.permute.xlu0 %1197
  %s1200 = scalar_lea.vmem [#allocation3], 56
  %1201 = vst.msk [vmem:[%s1200] sm:$0xff] %vm221, %v1198
  %1202 = vst.msk [vmem:[%s8] sm:$0xff] %vm221, %v1198
  %1204 = vrot.lane.b32.xlu0 %v1189, 96
  %v1205 = vpop.permute.xlu0 %1204
  %1207 = vst.msk [vmem:[%s9] sm:$0xff] %vm221, %v1205
  %v1208 = vld [vmem:[#allocation3] sm:$0xff]
  %v1209 = vld [vmem:[#allocation3 + $0x8] sm:$0xff]
  %v1210 = vld [vmem:[#allocation3 + $0x10] sm:$0xff]
  %v1211 = vld [vmem:[#allocation3 + $0x18] sm:$0xff]
  %v1212 = vld [vmem:[#allocation3 + $0x20] sm:$0xff]
  %v1213 = vld [vmem:[#allocation3 + $0x28] sm:$0xff]
  %v1214 = vld [vmem:[#allocation3 + $0x30] sm:$0xff]
  %v1215 = vld [vmem:[#allocation3 + $0x38] sm:$0xff]
  %v1216 = vld [vmem:[%s5] sm:$0xff]
  %v1217 = vld [vmem:[%s5 + $0x8] sm:$0xff]
  %v1218 = vld [vmem:[%s5 + $0x10] sm:$0xff]
  %v1219 = vld [vmem:[%s5 + $0x18] sm:$0xff]
  %v1220 = vld [vmem:[%s7] sm:$0x1]
  %v1222 = vlaneseq
  %v1223 = vshrl.u32 %v1222, 7
  %v1224 = vsub.s32 0, %v1223
  %v1225 = vrot.slane %v1220, %v1224
  %v1228 = vsel %vm221, %v1208, 0
  %v1231 = vsel %vm221, %v1209, 0
  %v1234 = vsel %vm221, %v1210, 0
  %v1237 = vsel %vm221, %v1211, 0
  %v1240 = vsel %vm221, %v1212, 0
  %v1243 = vsel %vm221, %v1213, 0
  %v1246 = vsel %vm221, %v1214, 0
  %v1249 = vsel %vm221, %v1215, 0
  %1251 = vmatprep.subr.mxu0 0.0
  %1252 = vmatpush1.msra.mxu0 %v1216
  %1253 = vmatprep.subr.mxu0 0.0
  %1254 = vmatpush1.msra.mxu0 %v1217
  %1255 = vmatprep.subr.mxu0 0.0
  %1256 = vmatpush1.msra.mxu0 %v1218
  %1257 = vmatprep.subr.mxu0 0.0
  %1258 = vmatpush1.msra.mxu0 %v1219
  %1259 = vmatprep.subr.mxu0 0.0
  %1260 = vmatpush1.msra.mxu0 0.0
  %1261 = vmatprep.subr.mxu0 0.0
  %1262 = vmatpush1.msra.mxu0 0.0
  %1263 = vmatprep.subr.mxu0 0.0
  %1264 = vmatpush1.msra.mxu0 0.0
  %1265 = vmatprep.subr.mxu0 0.0
  %1266 = vmatpush1.msra.mxu0 0.0
  %1267 = vmatprep.subr.mxu0 0.0
  %1268 = vmatpush1.msra.mxu0 0.0
  %1269 = vmatprep.subr.mxu0 0.0
  %1270 = vmatpush1.msra.mxu0 0.0
  %1271 = vmatprep.subr.mxu0 0.0
  %1272 = vmatpush1.msra.mxu0 0.0
  %1273 = vmatprep.subr.mxu0 0.0
  %1274 = vmatpush1.msra.mxu0 0.0
  %1275 = vmatprep.subr.mxu0 0.0
  %1276 = vmatpush1.msra.mxu0 0.0
  %1277 = vmatprep.subr.mxu0 0.0
  %1278 = vmatpush1.msra.mxu0 0.0
  %1279 = vmatprep.subr.mxu0 0.0
  %1280 = vmatpush1.msra.mxu0 0.0
  %1281 = vmatprep.subr.mxu0 0.0
  %1282 = vmatpush1.msra.mxu0 0.0
  %1283 = vmatprep.subr.mxu0 0.0
  %1284 = vmatpush1.msra.mxu0 0.0
  %1285 = vmatprep.subr.mxu0 0.0
  %1286 = vmatpush1.msra.mxu0 0.0
  %1287 = vmatprep.subr.mxu0 0.0
  %1288 = vmatpush1.msra.mxu0 0.0
  %1289 = vmatprep.subr.mxu0 0.0
  %1290 = vmatpush1.msra.mxu0 0.0
  %1291 = vmatprep.subr.mxu0 0.0
  %1292 = vmatpush1.msra.mxu0 0.0
  %1293 = vmatprep.subr.mxu0 0.0
  %1294 = vmatpush1.msra.mxu0 0.0
  %1295 = vmatprep.subr.mxu0 0.0
  %1296 = vmatpush1.msra.mxu0 0.0
  %1297 = vmatprep.subr.mxu0 0.0
  %1298 = vmatpush1.msra.mxu0 0.0
  %1299 = vmatprep.subr.mxu0 0.0
  %1300 = vmatpush1.msra.mxu0 0.0
  %1301 = vmatprep.subr.mxu0 0.0
  %1302 = vmatpush1.msra.mxu0 0.0
  %1303 = vmatprep.subr.mxu0 0.0
  %1304 = vmatpush1.msra.mxu0 0.0
  %1305 = vmatprep.subr.mxu0 0.0
  %1306 = vmatpush1.msra.mxu0 0.0
  %1307 = vmatprep.subr.mxu0 0.0
  %1308 = vmatpush1.msra.mxu0 0.0
  %1309 = vmatprep.subr.mxu0 0.0
  %1310 = vmatpush1.msra.mxu0 0.0
  %1311 = vmatprep.subr.mxu0 0.0
  %1312 = vmatpush1.msra.mxu0 0.0
  %1313 = vmatprep.subr.mxu0 0.0
  %1314 = vmatpush1.msra.mxu0 0.0
  %1315 = vmatprep.mubr.f32.mxu0 0.0
  %1316 = vmatmul.mubr.f32.gmra.mrb[0].mxu0 %v1228
  %v1317 = vpop.f32.mrb[0].mxu0
  %v1318 = vadd.f32 %v1225, %v1317
  %v1319 = vpop.f32.mrb[0].mxu0
  %1320 = vmatprep.mubr.f32.mxu0 0.0
  %1321 = vmatmul.mubr.f32.gmra.mrb[0].mxu0 %v1231
  %v1322 = vpop.f32.mrb[0].mxu0
  %v1323 = vadd.f32 %v1225, %v1322
  %v1324 = vpop.f32.mrb[0].mxu0
  %1325 = vmatprep.mubr.f32.mxu0 0.0
  %1326 = vmatmul.mubr.f32.gmra.mrb[0].mxu0 %v1234
  %v1327 = vpop.f32.mrb[0].mxu0
  %v1328 = vadd.f32 %v1225, %v1327
  %v1329 = vpop.f32.mrb[0].mxu0
  %1330 = vmatprep.mubr.f32.mxu0 0.0
  %1331 = vmatmul.mubr.f32.gmra.mrb[0].mxu0 %v1237
  %v1332 = vpop.f32.mrb[0].mxu0
  %v1333 = vadd.f32 %v1225, %v1332
  %v1334 = vpop.f32.mrb[0].mxu0
  %1335 = vmatprep.mubr.f32.mxu0 0.0
  %1336 = vmatmul.mubr.f32.gmra.mrb[0].mxu0 %v1240
  %v1337 = vpop.f32.mrb[0].mxu0
  %v1338 = vadd.f32 %v1225, %v1337
  %v1339 = vpop.f32.mrb[0].mxu0
  %1340 = vmatprep.mubr.f32.mxu0 0.0
  %1341 = vmatmul.mubr.f32.gmra.mrb[0].mxu0 %v1243
  %v1342 = vpop.f32.mrb[0].mxu0
  %v1343 = vadd.f32 %v1225, %v1342
  %v1344 = vpop.f32.mrb[0].mxu0
  %1345 = vmatprep.mubr.f32.mxu0 0.0
  %1346 = vmatmul.mubr.f32.gmra.mrb[0].mxu0 %v1246
  %v1347 = vpop.f32.mrb[0].mxu0
  %v1348 = vadd.f32 %v1225, %v1347
  %v1349 = vpop.f32.mrb[0].mxu0
  %1350 = vmatprep.mubr.f32.mxu0 0.0
  %1351 = vmatmul.mubr.f32.gmra.mrb[0].mxu0 %v1249
  %v1352 = vpop.f32.mrb[0].mxu0
  %v1353 = vadd.f32 %v1225, %v1352
  %v1354 = vpop.f32.mrb[0].mxu0
  %1355 = vdwg.mxu0
  %1356 = vst [vmem:[#allocation2] sm:$0xff] %v1318
  %1357 = vst [vmem:[#allocation2 + $0x8] sm:$0xff] %v1323
  %1358 = vst [vmem:[#allocation2 + $0x10] sm:$0xff] %v1328
  %1359 = vst [vmem:[#allocation2 + $0x18] sm:$0xff] %v1333
  %1360 = vst [vmem:[#allocation2 + $0x20] sm:$0xff] %v1338
  %1361 = vst [vmem:[#allocation2 + $0x28] sm:$0xff] %v1343
  %1362 = vst [vmem:[#allocation2 + $0x30] sm:$0xff] %v1348
  %1363 = vst [vmem:[#allocation2 + $0x38] sm:$0xff] %v1353
  %v1364 = vld [vmem:[%s6] sm:$0xff]
  %v1365 = vld [vmem:[%s6 + $0x8] sm:$0xff]
  %v1366 = vld [vmem:[%s6 + $0x10] sm:$0xff]
  %v1367 = vld [vmem:[%s6 + $0x18] sm:$0xff]
  %v1368 = vld [vmem:[#allocation2] sm:$0xff]
  %1369 = vmatprep.subr.mxu0 0.0
  %1370 = vmatpush1.msra.mxu0 %v1364
  %1371 = vmatprep.subr.mxu0 0.0
  %1372 = vmatpush1.msra.mxu0 %v1365
  %1373 = vmatprep.subr.mxu0 0.0
  %1374 = vmatpush1.msra.mxu0 %v1366
  %1375 = vmatprep.subr.mxu0 0.0
  %1376 = vmatpush1.msra.mxu0 %v1367
  %1377 = vmatprep.subr.mxu0 0.0
  %1378 = vmatpush1.msra.mxu0 0.0
  %1379 = vmatprep.subr.mxu0 0.0
  %1380 = vmatpush1.msra.mxu0 0.0
  %1381 = vmatprep.subr.mxu0 0.0
  %1382 = vmatpush1.msra.mxu0 0.0
  %1383 = vmatprep.subr.mxu0 0.0
  %1384 = vmatpush1.msra.mxu0 0.0
  %1385 = vmatprep.subr.mxu0 0.0
  %1386 = vmatpush1.msra.mxu0 0.0
  %1387 = vmatprep.subr.mxu0 0.0
  %1388 = vmatpush1.msra.mxu0 0.0
  %1389 = vmatprep.subr.mxu0 0.0
  %1390 = vmatpush1.msra.mxu0 0.0
  %1391 = vmatprep.subr.mxu0 0.0
  %1392 = vmatpush1.msra.mxu0 0.0
  %1393 = vmatprep.subr.mxu0 0.0
  %1394 = vmatpush1.msra.mxu0 0.0
  %1395 = vmatprep.subr.mxu0 0.0
  %1396 = vmatpush1.msra.mxu0 0.0
  %1397 = vmatprep.subr.mxu0 0.0
  %1398 = vmatpush1.msra.mxu0 0.0
  %1399 = vmatprep.subr.mxu0 0.0
  %1400 = vmatpush1.msra.mxu0 0.0
  %1401 = vmatprep.subr.mxu0 0.0
  %1402 = vmatpush1.msra.mxu0 0.0
  %1403 = vmatprep.subr.mxu0 0.0
  %1404 = vmatpush1.msra.mxu0 0.0
  %1405 = vmatprep.subr.mxu0 0.0
  %1406 = vmatpush1.msra.mxu0 0.0
  %1407 = vmatprep.subr.mxu0 0.0
  %1408 = vmatpush1.msra.mxu0 0.0
  %1409 = vmatprep.subr.mxu0 0.0
  %1410 = vmatpush1.msra.mxu0 0.0
  %1411 = vmatprep.subr.mxu0 0.0
  %1412 = vmatpush1.msra.mxu0 0.0
  %1413 = vmatprep.subr.mxu0 0.0
  %1414 = vmatpush1.msra.mxu0 0.0
  %1415 = vmatprep.subr.mxu0 0.0
  %1416 = vmatpush1.msra.mxu0 0.0
  %1417 = vmatprep.subr.mxu0 0.0
  %1418 = vmatpush1.msra.mxu0 0.0
  %1419 = vmatprep.subr.mxu0 0.0
  %1420 = vmatpush1.msra.mxu0 0.0
  %1421 = vmatprep.subr.mxu0 0.0
  %1422 = vmatpush1.msra.mxu0 0.0
  %1423 = vmatprep.subr.mxu0 0.0
  %1424 = vmatpush1.msra.mxu0 0.0
  %1425 = vmatprep.subr.mxu0 0.0
  %1426 = vmatpush1.msra.mxu0 0.0
  %1427 = vmatprep.subr.mxu0 0.0
  %1428 = vmatpush1.msra.mxu0 0.0
  %1429 = vmatprep.subr.mxu0 0.0
  %1430 = vmatpush1.msra.mxu0 0.0
  %1431 = vmatprep.subr.mxu0 0.0
  %1432 = vmatpush1.msra.mxu0 0.0
  %1433 = vmatprep.mubr.f32.mxu0 0.0
  %1434 = vmatmul.mubr.f32.gmra.mrb[0].mxu0 %v365
  %v1435 = vpop.f32.mrb[0].mxu0
  %v1436 = vadd.f32 0.0, %v1435
  %v1437 = vpop.f32.mrb[0].mxu0
  %1438 = vdwg.mxu0
  %v1439 = vadd.f32 %v1368, %v1436
  %v1440 = vxor.u32 %v1439, 2147483648
  %v1441 = vmul.f32 %v1440, 1.442695
  %v1442 = vpow.pop %v1441
  %v1443 = vadd.f32 %v1442, 1.0
  %v1444 = vrcp.pop %v1443
  %v1445 = vmul.f32 1.0, %v1444
  %v1446 = vtanh.pop %v1439
  %v1447 = vmul.f32 %v1445, 0.0
  %1449 = vrot.lane.b32.xlu0 %v1446, 32
  %v1450 = vpop.permute.xlu0 %1449
  %v1452 = vmul.f32 %v1445, %v1450
  %1454 = vrot.lane.b32.xlu0 %v1452, 32
  %v1455 = vpop.permute.xlu0 %1454
  %v1457 = vadd.f32 %v1447, %v1455
  %v1458 = vtanh.pop %v1457
  %1460 = vrot.lane.b32.xlu0 %v1458, 32
  %v1461 = vpop.permute.xlu0 %1460
  %v1463 = vmul.f32 %v1445, %v1461
  %v1464 = vld [vmem:[%s467] sm:$0xff]
  %1466 = vrot.lane.b32.xlu0 %v1463, 64
  %v1467 = vpop.permute.xlu0 %1466
  %v1468 = vsel %vm221, %v1467, 0
  %1470 = vmatprep.subr.mxu0 0.0
  %1471 = vmatpush1.msra.mxu0 %v1364
  %1472 = vmatprep.subr.mxu0 0.0
  %1473 = vmatpush1.msra.mxu0 %v1365
  %1474 = vmatprep.subr.mxu0 0.0
  %1475 = vmatpush1.msra.mxu0 %v1366
  %1476 = vmatprep.subr.mxu0 0.0
  %1477 = vmatpush1.msra.mxu0 %v1367
  %1478 = vmatprep.subr.mxu0 0.0
  %1479 = vmatpush1.msra.mxu0 0.0
  %1480 = vmatprep.subr.mxu0 0.0
  %1481 = vmatpush1.msra.mxu0 0.0
  %1482 = vmatprep.subr.mxu0 0.0
  %1483 = vmatpush1.msra.mxu0 0.0
  %1484 = vmatprep.subr.mxu0 0.0
  %1485 = vmatpush1.msra.mxu0 0.0
  %1486 = vmatprep.subr.mxu0 0.0
  %1487 = vmatpush1.msra.mxu0 0.0
  %1488 = vmatprep.subr.mxu0 0.0
  %1489 = vmatpush1.msra.mxu0 0.0
  %1490 = vmatprep.subr.mxu0 0.0
  %1491 = vmatpush1.msra.mxu0 0.0
  %1492 = vmatprep.subr.mxu0 0.0
  %1493 = vmatpush1.msra.mxu0 0.0
  %1494 = vmatprep.subr.mxu0 0.0
  %1495 = vmatpush1.msra.mxu0 0.0
  %1496 = vmatprep.subr.mxu0 0.0
  %1497 = vmatpush1.msra.mxu0 0.0
  %1498 = vmatprep.subr.mxu0 0.0
  %1499 = vmatpush1.msra.mxu0 0.0
  %1500 = vmatprep.subr.mxu0 0.0
  %1501 = vmatpush1.msra.mxu0 0.0
  %1502 = vmatprep.subr.mxu0 0.0
  %1503 = vmatpush1.msra.mxu0 0.0
  %1504 = vmatprep.subr.mxu0 0.0
  %1505 = vmatpush1.msra.mxu0 0.0
  %1506 = vmatprep.subr.mxu0 0.0
  %1507 = vmatpush1.msra.mxu0 0.0
  %1508 = vmatprep.subr.mxu0 0.0
  %1509 = vmatpush1.msra.mxu0 0.0
  %1510 = vmatprep.subr.mxu0 0.0
  %1511 = vmatpush1.msra.mxu0 0.0
  %1512 = vmatprep.subr.mxu0 0.0
  %1513 = vmatpush1.msra.mxu0 0.0
  %1514 = vmatprep.subr.mxu0 0.0
  %1515 = vmatpush1.msra.mxu0 0.0
  %1516 = vmatprep.subr.mxu0 0.0
  %1517 = vmatpush1.msra.mxu0 0.0
  %1518 = vmatprep.subr.mxu0 0.0
  %1519 = vmatpush1.msra.mxu0 0.0
  %1520 = vmatprep.subr.mxu0 0.0
  %1521 = vmatpush1.msra.mxu0 0.0
  %1522 = vmatprep.subr.mxu0 0.0
  %1523 = vmatpush1.msra.mxu0 0.0
  %1524 = vmatprep.subr.mxu0 0.0
  %1525 = vmatpush1.msra.mxu0 0.0
  %1526 = vmatprep.subr.mxu0 0.0
  %1527 = vmatpush1.msra.mxu0 0.0
  %1528 = vmatprep.subr.mxu0 0.0
  %1529 = vmatpush1.msra.mxu0 0.0
  %1530 = vmatprep.subr.mxu0 0.0
  %1531 = vmatpush1.msra.mxu0 0.0
  %1532 = vmatprep.subr.mxu0 0.0
  %1533 = vmatpush1.msra.mxu0 0.0
  %1534 = vmatprep.mubr.f32.mxu0 0.0
  %1535 = vmatmul.mubr.f32.gmra.mrb[0].mxu0 %v1468
  %v1536 = vpop.f32.mrb[0].mxu0
  %v1537 = vadd.f32 0.0, %v1536
  %v1538 = vpop.f32.mrb[0].mxu0
  %1539 = vdwg.mxu0
  %v1540 = vadd.f32 %v1464, %v1537
  %v1541 = vxor.u32 %v1540, 2147483648
  %v1542 = vmul.f32 %v1541, 1.442695
  %v1543 = vpow.pop %v1542
  %v1544 = vadd.f32 %v1543, 1.0
  %v1545 = vrcp.pop %v1544
  %v1546 = vmul.f32 1.0, %v1545
  %v1547 = vtanh.pop %v1540
  %v1548 = vmul.f32 %v1546, %v1457
  %1550 = vrot.lane.b32.xlu0 %v1547, 32
  %v1551 = vpop.permute.xlu0 %1550
  %v1553 = vmul.f32 %v1546, %v1551
  %1555 = vrot.lane.b32.xlu0 %v1553, 32
  %v1556 = vpop.permute.xlu0 %1555
  %v1558 = vadd.f32 %v1548, %v1556
  %v1559 = vtanh.pop %v1558
  %1561 = vrot.lane.b32.xlu0 %v1559, 32
  %v1562 = vpop.permute.xlu0 %1561
  %v1564 = vmul.f32 %v1546, %v1562
  %v1565 = vld [vmem:[%s572] sm:$0xff]
  %1567 = vrot.lane.b32.xlu0 %v1564, 64
  %v1568 = vpop.permute.xlu0 %1567
  %v1569 = vsel %vm221, %v1568, 0
  %1571 = vmatprep.subr.mxu0 0.0
  %1572 = vmatpush1.msra.mxu0 %v1364
  %1573 = vmatprep.subr.mxu0 0.0
  %1574 = vmatpush1.msra.mxu0 %v1365
  %1575 = vmatprep.subr.mxu0 0.0
  %1576 = vmatpush1.msra.mxu0 %v1366
  %1577 = vmatprep.subr.mxu0 0.0
  %1578 = vmatpush1.msra.mxu0 %v1367
  %1579 = vmatprep.subr.mxu0 0.0
  %1580 = vmatpush1.msra.mxu0 0.0
  %1581 = vmatprep.subr.mxu0 0.0
  %1582 = vmatpush1.msra.mxu0 0.0
  %1583 = vmatprep.subr.mxu0 0.0
  %1584 = vmatpush1.msra.mxu0 0.0
  %1585 = vmatprep.subr.mxu0 0.0
  %1586 = vmatpush1.msra.mxu0 0.0
  %1587 = vmatprep.subr.mxu0 0.0
  %1588 = vmatpush1.msra.mxu0 0.0
  %1589 = vmatprep.subr.mxu0 0.0
  %1590 = vmatpush1.msra.mxu0 0.0
  %1591 = vmatprep.subr.mxu0 0.0
  %1592 = vmatpush1.msra.mxu0 0.0
  %1593 = vmatprep.subr.mxu0 0.0
  %1594 = vmatpush1.msra.mxu0 0.0
  %1595 = vmatprep.subr.mxu0 0.0
  %1596 = vmatpush1.msra.mxu0 0.0
  %1597 = vmatprep.subr.mxu0 0.0
  %1598 = vmatpush1.msra.mxu0 0.0
  %1599 = vmatprep.subr.mxu0 0.0
  %1600 = vmatpush1.msra.mxu0 0.0
  %1601 = vmatprep.subr.mxu0 0.0
  %1602 = vmatpush1.msra.mxu0 0.0
  %1603 = vmatprep.subr.mxu0 0.0
  %1604 = vmatpush1.msra.mxu0 0.0
  %1605 = vmatprep.subr.mxu0 0.0
  %1606 = vmatpush1.msra.mxu0 0.0
  %1607 = vmatprep.subr.mxu0 0.0
  %1608 = vmatpush1.msra.mxu0 0.0
  %1609 = vmatprep.subr.mxu0 0.0
  %1610 = vmatpush1.msra.mxu0 0.0
  %1611 = vmatprep.subr.mxu0 0.0
  %1612 = vmatpush1.msra.mxu0 0.0
  %1613 = vmatprep.subr.mxu0 0.0
  %1614 = vmatpush1.msra.mxu0 0.0
  %1615 = vmatprep.subr.mxu0 0.0
  %1616 = vmatpush1.msra.mxu0 0.0
  %1617 = vmatprep.subr.mxu0 0.0
  %1618 = vmatpush1.msra.mxu0 0.0
  %1619 = vmatprep.subr.mxu0 0.0
  %1620 = vmatpush1.msra.mxu0 0.0
  %1621 = vmatprep.subr.mxu0 0.0
  %1622 = vmatpush1.msra.mxu0 0.0
  %1623 = vmatprep.subr.mxu0 0.0
  %1624 = vmatpush1.msra.mxu0 0.0
  %1625 = vmatprep.subr.mxu0 0.0
  %1626 = vmatpush1.msra.mxu0 0.0
  %1627 = vmatprep.subr.mxu0 0.0
  %1628 = vmatpush1.msra.mxu0 0.0
  %1629 = vmatprep.subr.mxu0 0.0
  %1630 = vmatpush1.msra.mxu0 0.0
  %1631 = vmatprep.subr.mxu0 0.0
  %1632 = vmatpush1.msra.mxu0 0.0
  %1633 = vmatprep.subr.mxu0 0.0
  %1634 = vmatpush1.msra.mxu0 0.0
  %1635 = vmatprep.mubr.f32.mxu0 0.0
  %1636 = vmatmul.mubr.f32.gmra.mrb[0].mxu0 %v1569
  %v1637 = vpop.f32.mrb[0].mxu0
  %v1638 = vadd.f32 0.0, %v1637
  %v1639 = vpop.f32.mrb[0].mxu0
  %1640 = vdwg.mxu0
  %v1641 = vadd.f32 %v1565, %v1638
  %v1642 = vxor.u32 %v1641, 2147483648
  %v1643 = vmul.f32 %v1642, 1.442695
  %v1644 = vpow.pop %v1643
  %v1645 = vadd.f32 %v1644, 1.0
  %v1646 = vrcp.pop %v1645
  %v1647 = vmul.f32 1.0, %v1646
  %v1648 = vtanh.pop %v1641
  %v1649 = vmul.f32 %v1647, %v1558
  %1651 = vrot.lane.b32.xlu0 %v1648, 32
  %v1652 = vpop.permute.xlu0 %1651
  %v1654 = vmul.f32 %v1647, %v1652
  %1656 = vrot.lane.b32.xlu0 %v1654, 32
  %v1657 = vpop.permute.xlu0 %1656
  %v1659 = vadd.f32 %v1649, %v1657
  %v1660 = vtanh.pop %v1659
  %1662 = vrot.lane.b32.xlu0 %v1660, 32
  %v1663 = vpop.permute.xlu0 %1662
  %v1665 = vmul.f32 %v1647, %v1663
  %v1666 = vld [vmem:[%s677] sm:$0xff]
  %1668 = vrot.lane.b32.xlu0 %v1665, 64
  %v1669 = vpop.permute.xlu0 %1668
  %v1670 = vsel %vm221, %v1669, 0
  %1672 = vmatprep.subr.mxu0 0.0
  %1673 = vmatpush1.msra.mxu0 %v1364
  %1674 = vmatprep.subr.mxu0 0.0
  %1675 = vmatpush1.msra.mxu0 %v1365
  %1676 = vmatprep.subr.mxu0 0.0
  %1677 = vmatpush1.msra.mxu0 %v1366
  %1678 = vmatprep.subr.mxu0 0.0
  %1679 = vmatpush1.msra.mxu0 %v1367
  %1680 = vmatprep.subr.mxu0 0.0
  %1681 = vmatpush1.msra.mxu0 0.0
  %1682 = vmatprep.subr.mxu0 0.0
  %1683 = vmatpush1.msra.mxu0 0.0
  %1684 = vmatprep.subr.mxu0 0.0
  %1685 = vmatpush1.msra.mxu0 0.0
  %1686 = vmatprep.subr.mxu0 0.0
  %1687 = vmatpush1.msra.mxu0 0.0
  %1688 = vmatprep.subr.mxu0 0.0
  %1689 = vmatpush1.msra.mxu0 0.0
  %1690 = vmatprep.subr.mxu0 0.0
  %1691 = vmatpush1.msra.mxu0 0.0
  %1692 = vmatprep.subr.mxu0 0.0
  %1693 = vmatpush1.msra.mxu0 0.0
  %1694 = vmatprep.subr.mxu0 0.0
  %1695 = vmatpush1.msra.mxu0 0.0
  %1696 = vmatprep.subr.mxu0 0.0
  %1697 = vmatpush1.msra.mxu0 0.0
  %1698 = vmatprep.subr.mxu0 0.0
  %1699 = vmatpush1.msra.mxu0 0.0
  %1700 = vmatprep.subr.mxu0 0.0
  %1701 = vmatpush1.msra.mxu0 0.0
  %1702 = vmatprep.subr.mxu0 0.0
  %1703 = vmatpush1.msra.mxu0 0.0
  %1704 = vmatprep.subr.mxu0 0.0
  %1705 = vmatpush1.msra.mxu0 0.0
  %1706 = vmatprep.subr.mxu0 0.0
  %1707 = vmatpush1.msra.mxu0 0.0
  %1708 = vmatprep.subr.mxu0 0.0
  %1709 = vmatpush1.msra.mxu0 0.0
  %1710 = vmatprep.subr.mxu0 0.0
  %1711 = vmatpush1.msra.mxu0 0.0
  %1712 = vmatprep.subr.mxu0 0.0
  %1713 = vmatpush1.msra.mxu0 0.0
  %1714 = vmatprep.subr.mxu0 0.0
  %1715 = vmatpush1.msra.mxu0 0.0
  %1716 = vmatprep.subr.mxu0 0.0
  %1717 = vmatpush1.msra.mxu0 0.0
  %1718 = vmatprep.subr.mxu0 0.0
  %1719 = vmatpush1.msra.mxu0 0.0
  %1720 = vmatprep.subr.mxu0 0.0
  %1721 = vmatpush1.msra.mxu0 0.0
  %1722 = vmatprep.subr.mxu0 0.0
  %1723 = vmatpush1.msra.mxu0 0.0
  %1724 = vmatprep.subr.mxu0 0.0
  %1725 = vmatpush1.msra.mxu0 0.0
  %1726 = vmatprep.subr.mxu0 0.0
  %1727 = vmatpush1.msra.mxu0 0.0
  %1728 = vmatprep.subr.mxu0 0.0
  %1729 = vmatpush1.msra.mxu0 0.0
  %1730 = vmatprep.subr.mxu0 0.0
  %1731 = vmatpush1.msra.mxu0 0.0
  %1732 = vmatprep.subr.mxu0 0.0
  %1733 = vmatpush1.msra.mxu0 0.0
  %1734 = vmatprep.subr.mxu0 0.0
  %1735 = vmatpush1.msra.mxu0 0.0
  %1736 = vmatprep.mubr.f32.mxu0 0.0
  %1737 = vmatmul.mubr.f32.gmra.mrb[0].mxu0 %v1670
  %v1738 = vpop.f32.mrb[0].mxu0
  %v1739 = vadd.f32 0.0, %v1738
  %v1740 = vpop.f32.mrb[0].mxu0
  %1741 = vdwg.mxu0
  %v1742 = vadd.f32 %v1666, %v1739
  %v1743 = vxor.u32 %v1742, 2147483648
  %v1744 = vmul.f32 %v1743, 1.442695
  %v1745 = vpow.pop %v1744
  %v1746 = vadd.f32 %v1745, 1.0
  %v1747 = vrcp.pop %v1746
  %v1748 = vmul.f32 1.0, %v1747
  %v1749 = vtanh.pop %v1742
  %v1750 = vmul.f32 %v1748, %v1659
  %1752 = vrot.lane.b32.xlu0 %v1749, 32
  %v1753 = vpop.permute.xlu0 %1752
  %v1755 = vmul.f32 %v1748, %v1753
  %1757 = vrot.lane.b32.xlu0 %v1755, 32
  %v1758 = vpop.permute.xlu0 %1757
  %v1760 = vadd.f32 %v1750, %v1758
  %v1761 = vtanh.pop %v1760
  %1763 = vrot.lane.b32.xlu0 %v1761, 32
  %v1764 = vpop.permute.xlu0 %1763
  %v1766 = vmul.f32 %v1748, %v1764
  %v1767 = vld [vmem:[%s782] sm:$0xff]
  %1769 = vrot.lane.b32.xlu0 %v1766, 64
  %v1770 = vpop.permute.xlu0 %1769
  %v1771 = vsel %vm221, %v1770, 0
  %1773 = vmatprep.subr.mxu0 0.0
  %1774 = vmatpush1.msra.mxu0 %v1364
  %1775 = vmatprep.subr.mxu0 0.0
  %1776 = vmatpush1.msra.mxu0 %v1365
  %1777 = vmatprep.subr.mxu0 0.0
  %1778 = vmatpush1.msra.mxu0 %v1366
  %1779 = vmatprep.subr.mxu0 0.0
  %1780 = vmatpush1.msra.mxu0 %v1367
  %1781 = vmatprep.subr.mxu0 0.0
  %1782 = vmatpush1.msra.mxu0 0.0
  %1783 = vmatprep.subr.mxu0 0.0
  %1784 = vmatpush1.msra.mxu0 0.0
  %1785 = vmatprep.subr.mxu0 0.0
  %1786 = vmatpush1.msra.mxu0 0.0
  %1787 = vmatprep.subr.mxu0 0.0
  %1788 = vmatpush1.msra.mxu0 0.0
  %1789 = vmatprep.subr.mxu0 0.0
  %1790 = vmatpush1.msra.mxu0 0.0
  %1791 = vmatprep.subr.mxu0 0.0
  %1792 = vmatpush1.msra.mxu0 0.0
  %1793 = vmatprep.subr.mxu0 0.0
  %1794 = vmatpush1.msra.mxu0 0.0
  %1795 = vmatprep.subr.mxu0 0.0
  %1796 = vmatpush1.msra.mxu0 0.0
  %1797 = vmatprep.subr.mxu0 0.0
  %1798 = vmatpush1.msra.mxu0 0.0
  %1799 = vmatprep.subr.mxu0 0.0
  %1800 = vmatpush1.msra.mxu0 0.0
  %1801 = vmatprep.subr.mxu0 0.0
  %1802 = vmatpush1.msra.mxu0 0.0
  %1803 = vmatprep.subr.mxu0 0.0
  %1804 = vmatpush1.msra.mxu0 0.0
  %1805 = vmatprep.subr.mxu0 0.0
  %1806 = vmatpush1.msra.mxu0 0.0
  %1807 = vmatprep.subr.mxu0 0.0
  %1808 = vmatpush1.msra.mxu0 0.0
  %1809 = vmatprep.subr.mxu0 0.0
  %1810 = vmatpush1.msra.mxu0 0.0
  %1811 = vmatprep.subr.mxu0 0.0
  %1812 = vmatpush1.msra.mxu0 0.0
  %1813 = vmatprep.subr.mxu0 0.0
  %1814 = vmatpush1.msra.mxu0 0.0
  %1815 = vmatprep.subr.mxu0 0.0
  %1816 = vmatpush1.msra.mxu0 0.0
  %1817 = vmatprep.subr.mxu0 0.0
  %1818 = vmatpush1.msra.mxu0 0.0
  %1819 = vmatprep.subr.mxu0 0.0
  %1820 = vmatpush1.msra.mxu0 0.0
  %1821 = vmatprep.subr.mxu0 0.0
  %1822 = vmatpush1.msra.mxu0 0.0
  %1823 = vmatprep.subr.mxu0 0.0
  %1824 = vmatpush1.msra.mxu0 0.0
  %1825 = vmatprep.subr.mxu0 0.0
  %1826 = vmatpush1.msra.mxu0 0.0
  %1827 = vmatprep.subr.mxu0 0.0
  %1828 = vmatpush1.msra.mxu0 0.0
  %1829 = vmatprep.subr.mxu0 0.0
  %1830 = vmatpush1.msra.mxu0 0.0
  %1831 = vmatprep.subr.mxu0 0.0
  %1832 = vmatpush1.msra.mxu0 0.0
  %1833 = vmatprep.subr.mxu0 0.0
  %1834 = vmatpush1.msra.mxu0 0.0
  %1835 = vmatprep.subr.mxu0 0.0
  %1836 = vmatpush1.msra.mxu0 0.0
  %1837 = vmatprep.mubr.f32.mxu0 0.0
  %1838 = vmatmul.mubr.f32.gmra.mrb[0].mxu0 %v1771
  %v1839 = vpop.f32.mrb[0].mxu0
  %v1840 = vadd.f32 0.0, %v1839
  %v1841 = vpop.f32.mrb[0].mxu0
  %1842 = vdwg.mxu0
  %v1843 = vadd.f32 %v1767, %v1840
  %v1844 = vxor.u32 %v1843, 2147483648
  %v1845 = vmul.f32 %v1844, 1.442695
  %v1846 = vpow.pop %v1845
  %v1847 = vadd.f32 %v1846, 1.0
  %v1848 = vrcp.pop %v1847
  %v1849 = vmul.f32 1.0, %v1848
  %v1850 = vtanh.pop %v1843
  %v1851 = vmul.f32 %v1849, %v1760
  %1853 = vrot.lane.b32.xlu0 %v1850, 32
  %v1854 = vpop.permute.xlu0 %1853
  %v1856 = vmul.f32 %v1849, %v1854
  %1858 = vrot.lane.b32.xlu0 %v1856, 32
  %v1859 = vpop.permute.xlu0 %1858
  %v1861 = vadd.f32 %v1851, %v1859
  %v1862 = vtanh.pop %v1861
  %1864 = vrot.lane.b32.xlu0 %v1862, 32
  %v1865 = vpop.permute.xlu0 %1864
  %v1867 = vmul.f32 %v1849, %v1865
  %v1868 = vld [vmem:[%s887] sm:$0xff]
  %1870 = vrot.lane.b32.xlu0 %v1867, 64
  %v1871 = vpop.permute.xlu0 %1870
  %v1872 = vsel %vm221, %v1871, 0
  %1874 = vmatprep.subr.mxu0 0.0
  %1875 = vmatpush1.msra.mxu0 %v1364
  %1876 = vmatprep.subr.mxu0 0.0
  %1877 = vmatpush1.msra.mxu0 %v1365
  %1878 = vmatprep.subr.mxu0 0.0
  %1879 = vmatpush1.msra.mxu0 %v1366
  %1880 = vmatprep.subr.mxu0 0.0
  %1881 = vmatpush1.msra.mxu0 %v1367
  %1882 = vmatprep.subr.mxu0 0.0
  %1883 = vmatpush1.msra.mxu0 0.0
  %1884 = vmatprep.subr.mxu0 0.0
  %1885 = vmatpush1.msra.mxu0 0.0
  %1886 = vmatprep.subr.mxu0 0.0
  %1887 = vmatpush1.msra.mxu0 0.0
  %1888 = vmatprep.subr.mxu0 0.0
  %1889 = vmatpush1.msra.mxu0 0.0
  %1890 = vmatprep.subr.mxu0 0.0
  %1891 = vmatpush1.msra.mxu0 0.0
  %1892 = vmatprep.subr.mxu0 0.0
  %1893 = vmatpush1.msra.mxu0 0.0
  %1894 = vmatprep.subr.mxu0 0.0
  %1895 = vmatpush1.msra.mxu0 0.0
  %1896 = vmatprep.subr.mxu0 0.0
  %1897 = vmatpush1.msra.mxu0 0.0
  %1898 = vmatprep.subr.mxu0 0.0
  %1899 = vmatpush1.msra.mxu0 0.0
  %1900 = vmatprep.subr.mxu0 0.0
  %1901 = vmatpush1.msra.mxu0 0.0
  %1902 = vmatprep.subr.mxu0 0.0
  %1903 = vmatpush1.msra.mxu0 0.0
  %1904 = vmatprep.subr.mxu0 0.0
  %1905 = vmatpush1.msra.mxu0 0.0
  %1906 = vmatprep.subr.mxu0 0.0
  %1907 = vmatpush1.msra.mxu0 0.0
  %1908 = vmatprep.subr.mxu0 0.0
  %1909 = vmatpush1.msra.mxu0 0.0
  %1910 = vmatprep.subr.mxu0 0.0
  %1911 = vmatpush1.msra.mxu0 0.0
  %1912 = vmatprep.subr.mxu0 0.0
  %1913 = vmatpush1.msra.mxu0 0.0
  %1914 = vmatprep.subr.mxu0 0.0
  %1915 = vmatpush1.msra.mxu0 0.0
  %1916 = vmatprep.subr.mxu0 0.0
  %1917 = vmatpush1.msra.mxu0 0.0
  %1918 = vmatprep.subr.mxu0 0.0
  %1919 = vmatpush1.msra.mxu0 0.0
  %1920 = vmatprep.subr.mxu0 0.0
  %1921 = vmatpush1.msra.mxu0 0.0
  %1922 = vmatprep.subr.mxu0 0.0
  %1923 = vmatpush1.msra.mxu0 0.0
  %1924 = vmatprep.subr.mxu0 0.0
  %1925 = vmatpush1.msra.mxu0 0.0
  %1926 = vmatprep.subr.mxu0 0.0
  %1927 = vmatpush1.msra.mxu0 0.0
  %1928 = vmatprep.subr.mxu0 0.0
  %1929 = vmatpush1.msra.mxu0 0.0
  %1930 = vmatprep.subr.mxu0 0.0
  %1931 = vmatpush1.msra.mxu0 0.0
  %1932 = vmatprep.subr.mxu0 0.0
  %1933 = vmatpush1.msra.mxu0 0.0
  %1934 = vmatprep.subr.mxu0 0.0
  %1935 = vmatpush1.msra.mxu0 0.0
  %1936 = vmatprep.subr.mxu0 0.0
  %1937 = vmatpush1.msra.mxu0 0.0
  %1938 = vmatprep.mubr.f32.mxu0 0.0
  %1939 = vmatmul.mubr.f32.gmra.mrb[0].mxu0 %v1872
  %v1940 = vpop.f32.mrb[0].mxu0
  %v1941 = vadd.f32 0.0, %v1940
  %v1942 = vpop.f32.mrb[0].mxu0
  %1943 = vdwg.mxu0
  %v1944 = vadd.f32 %v1868, %v1941
  %v1945 = vxor.u32 %v1944, 2147483648
  %v1946 = vmul.f32 %v1945, 1.442695
  %v1947 = vpow.pop %v1946
  %v1948 = vadd.f32 %v1947, 1.0
  %v1949 = vrcp.pop %v1948
  %v1950 = vmul.f32 1.0, %v1949
  %v1951 = vtanh.pop %v1944
  %v1952 = vmul.f32 %v1950, %v1861
  %1954 = vrot.lane.b32.xlu0 %v1951, 32
  %v1955 = vpop.permute.xlu0 %1954
  %v1957 = vmul.f32 %v1950, %v1955
  %1959 = vrot.lane.b32.xlu0 %v1957, 32
  %v1960 = vpop.permute.xlu0 %1959
  %v1962 = vadd.f32 %v1952, %v1960
  %v1963 = vtanh.pop %v1962
  %1965 = vrot.lane.b32.xlu0 %v1963, 32
  %v1966 = vpop.permute.xlu0 %1965
  %v1968 = vmul.f32 %v1950, %v1966
  %v1969 = vld [vmem:[%s992] sm:$0xff]
  %1971 = vrot.lane.b32.xlu0 %v1968, 64
  %v1972 = vpop.permute.xlu0 %1971
  %v1973 = vsel %vm221, %v1972, 0
  %1975 = vmatprep.subr.mxu0 0.0
  %1976 = vmatpush1.msra.mxu0 %v1364
  %1977 = vmatprep.subr.mxu0 0.0
  %1978 = vmatpush1.msra.mxu0 %v1365
  %1979 = vmatprep.subr.mxu0 0.0
  %1980 = vmatpush1.msra.mxu0 %v1366
  %1981 = vmatprep.subr.mxu0 0.0
  %1982 = vmatpush1.msra.mxu0 %v1367
  %1983 = vmatprep.subr.mxu0 0.0
  %1984 = vmatpush1.msra.mxu0 0.0
  %1985 = vmatprep.subr.mxu0 0.0
  %1986 = vmatpush1.msra.mxu0 0.0
  %1987 = vmatprep.subr.mxu0 0.0
  %1988 = vmatpush1.msra.mxu0 0.0
  %1989 = vmatprep.subr.mxu0 0.0
  %1990 = vmatpush1.msra.mxu0 0.0
  %1991 = vmatprep.subr.mxu0 0.0
  %1992 = vmatpush1.msra.mxu0 0.0
  %1993 = vmatprep.subr.mxu0 0.0
  %1994 = vmatpush1.msra.mxu0 0.0
  %1995 = vmatprep.subr.mxu0 0.0
  %1996 = vmatpush1.msra.mxu0 0.0
  %1997 = vmatprep.subr.mxu0 0.0
  %1998 = vmatpush1.msra.mxu0 0.0
  %1999 = vmatprep.subr.mxu0 0.0
  %2000 = vmatpush1.msra.mxu0 0.0
  %2001 = vmatprep.subr.mxu0 0.0
  %2002 = vmatpush1.msra.mxu0 0.0
  %2003 = vmatprep.subr.mxu0 0.0
  %2004 = vmatpush1.msra.mxu0 0.0
  %2005 = vmatprep.subr.mxu0 0.0
  %2006 = vmatpush1.msra.mxu0 0.0
  %2007 = vmatprep.subr.mxu0 0.0
  %2008 = vmatpush1.msra.mxu0 0.0
  %2009 = vmatprep.subr.mxu0 0.0
  %2010 = vmatpush1.msra.mxu0 0.0
  %2011 = vmatprep.subr.mxu0 0.0
  %2012 = vmatpush1.msra.mxu0 0.0
  %2013 = vmatprep.subr.mxu0 0.0
  %2014 = vmatpush1.msra.mxu0 0.0
  %2015 = vmatprep.subr.mxu0 0.0
  %2016 = vmatpush1.msra.mxu0 0.0
  %2017 = vmatprep.subr.mxu0 0.0
  %2018 = vmatpush1.msra.mxu0 0.0
  %2019 = vmatprep.subr.mxu0 0.0
  %2020 = vmatpush1.msra.mxu0 0.0
  %2021 = vmatprep.subr.mxu0 0.0
  %2022 = vmatpush1.msra.mxu0 0.0
  %2023 = vmatprep.subr.mxu0 0.0
  %2024 = vmatpush1.msra.mxu0 0.0
  %2025 = vmatprep.subr.mxu0 0.0
  %2026 = vmatpush1.msra.mxu0 0.0
  %2027 = vmatprep.subr.mxu0 0.0
  %2028 = vmatpush1.msra.mxu0 0.0
  %2029 = vmatprep.subr.mxu0 0.0
  %2030 = vmatpush1.msra.mxu0 0.0
  %2031 = vmatprep.subr.mxu0 0.0
  %2032 = vmatpush1.msra.mxu0 0.0
  %2033 = vmatprep.subr.mxu0 0.0
  %2034 = vmatpush1.msra.mxu0 0.0
  %2035 = vmatprep.subr.mxu0 0.0
  %2036 = vmatpush1.msra.mxu0 0.0
  %2037 = vmatprep.subr.mxu0 0.0
  %2038 = vmatpush1.msra.mxu0 0.0
  %2039 = vmatprep.mubr.f32.mxu0 0.0
  %2040 = vmatmul.mubr.f32.gmra.mrb[0].mxu0 %v1973
  %v2041 = vpop.f32.mrb[0].mxu0
  %v2042 = vadd.f32 0.0, %v2041
  %v2043 = vpop.f32.mrb[0].mxu0
  %2044 = vdwg.mxu0
  %v2045 = vadd.f32 %v1969, %v2042
  %v2046 = vxor.u32 %v2045, 2147483648
  %v2047 = vmul.f32 %v2046, 1.442695
  %v2048 = vpow.pop %v2047
  %v2049 = vadd.f32 %v2048, 1.0
  %v2050 = vrcp.pop %v2049
  %v2051 = vmul.f32 1.0, %v2050
  %v2052 = vtanh.pop %v2045
  %v2053 = vmul.f32 %v2051, %v1962
  %2055 = vrot.lane.b32.xlu0 %v2052, 32
  %v2056 = vpop.permute.xlu0 %2055
  %v2058 = vmul.f32 %v2051, %v2056
  %2060 = vrot.lane.b32.xlu0 %v2058, 32
  %v2061 = vpop.permute.xlu0 %2060
  %v2063 = vadd.f32 %v2053, %v2061
  %v2064 = vtanh.pop %v2063
  %2066 = vrot.lane.b32.xlu0 %v2064, 32
  %v2067 = vpop.permute.xlu0 %2066
  %v2069 = vmul.f32 %v2051, %v2067
  %v2070 = vld [vmem:[%s1097] sm:$0xff]
  %2072 = vrot.lane.b32.xlu0 %v2069, 64
  %v2073 = vpop.permute.xlu0 %2072
  %v2074 = vsel %vm221, %v2073, 0
  %2076 = vmatprep.subr.mxu0 0.0
  %2077 = vmatpush1.msra.mxu0 %v1364
  %2078 = vmatprep.subr.mxu0 0.0
  %2079 = vmatpush1.msra.mxu0 %v1365
  %2080 = vmatprep.subr.mxu0 0.0
  %2081 = vmatpush1.msra.mxu0 %v1366
  %2082 = vmatprep.subr.mxu0 0.0
  %2083 = vmatpush1.msra.mxu0 %v1367
  %2084 = vmatprep.subr.mxu0 0.0
  %2085 = vmatpush1.msra.mxu0 0.0
  %2086 = vmatprep.subr.mxu0 0.0
  %2087 = vmatpush1.msra.mxu0 0.0
  %2088 = vmatprep.subr.mxu0 0.0
  %2089 = vmatpush1.msra.mxu0 0.0
  %2090 = vmatprep.subr.mxu0 0.0
  %2091 = vmatpush1.msra.mxu0 0.0
  %2092 = vmatprep.subr.mxu0 0.0
  %2093 = vmatpush1.msra.mxu0 0.0
  %2094 = vmatprep.subr.mxu0 0.0
  %2095 = vmatpush1.msra.mxu0 0.0
  %2096 = vmatprep.subr.mxu0 0.0
  %2097 = vmatpush1.msra.mxu0 0.0
  %2098 = vmatprep.subr.mxu0 0.0
  %2099 = vmatpush1.msra.mxu0 0.0
  %2100 = vmatprep.subr.mxu0 0.0
  %2101 = vmatpush1.msra.mxu0 0.0
  %2102 = vmatprep.subr.mxu0 0.0
  %2103 = vmatpush1.msra.mxu0 0.0
  %2104 = vmatprep.subr.mxu0 0.0
  %2105 = vmatpush1.msra.mxu0 0.0
  %2106 = vmatprep.subr.mxu0 0.0
  %2107 = vmatpush1.msra.mxu0 0.0
  %2108 = vmatprep.subr.mxu0 0.0
  %2109 = vmatpush1.msra.mxu0 0.0
  %2110 = vmatprep.subr.mxu0 0.0
  %2111 = vmatpush1.msra.mxu0 0.0
  %2112 = vmatprep.subr.mxu0 0.0
  %2113 = vmatpush1.msra.mxu0 0.0
  %2114 = vmatprep.subr.mxu0 0.0
  %2115 = vmatpush1.msra.mxu0 0.0
  %2116 = vmatprep.subr.mxu0 0.0
  %2117 = vmatpush1.msra.mxu0 0.0
  %2118 = vmatprep.subr.mxu0 0.0
  %2119 = vmatpush1.msra.mxu0 0.0
  %2120 = vmatprep.subr.mxu0 0.0
  %2121 = vmatpush1.msra.mxu0 0.0
  %2122 = vmatprep.subr.mxu0 0.0
  %2123 = vmatpush1.msra.mxu0 0.0
  %2124 = vmatprep.subr.mxu0 0.0
  %2125 = vmatpush1.msra.mxu0 0.0
  %2126 = vmatprep.subr.mxu0 0.0
  %2127 = vmatpush1.msra.mxu0 0.0
  %2128 = vmatprep.subr.mxu0 0.0
  %2129 = vmatpush1.msra.mxu0 0.0
  %2130 = vmatprep.subr.mxu0 0.0
  %2131 = vmatpush1.msra.mxu0 0.0
  %2132 = vmatprep.subr.mxu0 0.0
  %2133 = vmatpush1.msra.mxu0 0.0
  %2134 = vmatprep.subr.mxu0 0.0
  %2135 = vmatpush1.msra.mxu0 0.0
  %2136 = vmatprep.subr.mxu0 0.0
  %2137 = vmatpush1.msra.mxu0 0.0
  %2138 = vmatprep.subr.mxu0 0.0
  %2139 = vmatpush1.msra.mxu0 0.0
  %2140 = vmatprep.mubr.f32.mxu0 0.0
  %2141 = vmatmul.mubr.f32.gmra.mrb[0].mxu0 %v2074
  %v2142 = vpop.f32.mrb[0].mxu0
  %v2143 = vadd.f32 0.0, %v2142
  %v2144 = vpop.f32.mrb[0].mxu0
  %2145 = vdwg.mxu0
  %v2146 = vadd.f32 %v2070, %v2143
  %v2147 = vxor.u32 %v2146, 2147483648
  %v2148 = vmul.f32 %v2147, 1.442695
  %v2149 = vpow.pop %v2148
  %v2150 = vadd.f32 %v2149, 1.0
  %v2151 = vrcp.pop %v2150
  %v2152 = vmul.f32 1.0, %v2151
  %v2153 = vtanh.pop %v2146
  %v2154 = vmul.f32 %v2152, %v2063
  %2156 = vrot.lane.b32.xlu0 %v2153, 32
  %v2157 = vpop.permute.xlu0 %2156
  %v2159 = vmul.f32 %v2152, %v2157
  %2161 = vrot.lane.b32.xlu0 %v2159, 32
  %v2162 = vpop.permute.xlu0 %2161
  %v2164 = vadd.f32 %v2154, %v2162
  %v2165 = vtanh.pop %v2164
  %2167 = vrot.lane.b32.xlu0 %v2165, 32
  %v2168 = vpop.permute.xlu0 %2167
  %v2170 = vmul.f32 %v2152, %v2168
  %2172 = vrot.lane.b32.xlu0 %v2170, 64
  %v2173 = vpop.permute.xlu0 %2172
  %s2175 = scalar_lea.vmem %s8, 8
  %2176 = vst.msk [vmem:[%s2175] sm:$0xff] %vm221, %v2173
  %2178 = vrot.lane.b32.xlu0 %v2164, 96
  %v2179 = vpop.permute.xlu0 %2178
  %s2181 = scalar_lea.vmem %s9, 8
  %2182 = vst.msk [vmem:[%s2181] sm:$0xff] %vm221, %v2179
  // Predicated region
  $region34: #{encoder_forward.1} parent=0 // pred_check
    _
  $region35: #{encoder_forward.1} parent=0 // pred_check_branch
    %2184 = sbr.rel (0) target = $region37
  $region36: #{encoder_forward.1} parent=0 // pred_region
    _
  $region37: #{encoder_forward.1} parent=0 // pred_fallthru
    _
  // Predicated region
  $region38: #{encoder_forward.1} parent=0 // pred_check
    _
  $region39: #{encoder_forward.1} parent=0 // pred_check_branch
    %2186 = sbr.rel (0) target = $region41
  $region40: #{encoder_forward.1} parent=0 // pred_region
    _
  $region41: #{encoder_forward.1} parent=0 // pred_fallthru
    _
  // Predicated region
  $region42: #{encoder_forward.1} parent=0 // pred_check
    _
  $region43: #{encoder_forward.1} parent=0 // pred_check_branch
    %2188 = sbr.rel (0) target = $region45
  $region44: #{encoder_forward.1} parent=0 // pred_region
    _
  $region45: #{encoder_forward.1} parent=0 // pred_fallthru
    _
  // Predicated region
  $region46: #{encoder_forward.1} parent=0 // pred_check
    _
  $region47: #{encoder_forward.1} parent=0 // pred_check_branch
    %2190 = sbr.rel (0) target = $region49
  $region48: #{encoder_forward.1} parent=0 // pred_region
    _
  $region49: #{encoder_forward.1} parent=0 // pred_fallthru
    _

</llo_original>
